<compile_context>
chip_gen: v7x
topology: tpu7x:2x2x1
jax: 0.10.0
libtpu: 0.0.40
codegen_flags: <defaults>
</compile_context>

<pallas_src>
import functools

import jax
import jax.numpy as jnp
from jax import lax
from jax.experimental import pallas as pl
from jax.experimental.pallas import tpu as pltpu


def _hybrid_kernel(xp_ref, whh_hbm, wflow_hbm, wout_hbm, bflow_ref, bout_ref,
                   y_ref, last_ref,
                   whh_sc, wflow_sc, wout_sc, h_sc, c_sc, sem,
                   *, t_valid, masked, unroll):
    b = pl.program_id(0)      # batch block (parallel)
    t = pl.program_id(1)      # time block (sequential recurrence)
    del b

    # Fresh state + one-time DMA of loop-invariant weights into
    # single-buffered VMEM scratch at the start of each batch block's sweep.
    @pl.when(t == 0)
    def _():
        c_whh = pltpu.make_async_copy(whh_hbm, whh_sc, sem.at[0])
        c_flw = pltpu.make_async_copy(wflow_hbm, wflow_sc, sem.at[1])
        c_out = pltpu.make_async_copy(wout_hbm, wout_sc, sem.at[2])
        c_whh.start()
        c_flw.start()
        c_out.start()
        # h = c = zeros(batch, hidden)   (== self._init_latent(x))
        h_sc[...] = jnp.zeros_like(h_sc)
        c_sc[...] = jnp.zeros_like(c_sc)
        c_whh.wait()
        c_flw.wait()
        c_out.wait()

    tb = y_ref.shape[0]
    H = y_ref.shape[-1]

    # Loop-invariant operands, loaded once per grid step.
    whh = whh_sc[...]          # (H, 4H), columns grouped [i | f | o | g]
    wflow = wflow_sc[...]      # (H, H)
    bflow = bflow_ref[...]     # (1, H)

    def step(tt, carry):
        h, c = carry
        # One fused, lane-dense recurrent matmul: (Bb, H) @ (H, 4H).
        # xproj already holds x_t @ W_ih^T + b_ih + b_hh (gate-packed).
        z = xp_ref[tt] + jnp.dot(h, whh, preferred_element_type=jnp.float32)
        sig = jax.nn.sigmoid(z[:, :3 * H])          # i, f, o in one EUP pass
        i_g = sig[:, 0:H]
        f_g = sig[:, H:2 * H]
        o_g = sig[:, 2 * H:3 * H]
        g_g = jnp.tanh(z[:, 3 * H:])
        c_new = f_g * c + i_g * g_g
        h_lstm = o_g * jnp.tanh(c_new)
        # flow: h = tanh(W_flow h + b_flow)
        h_new = jnp.tanh(
            jnp.dot(h_lstm, wflow, preferred_element_type=jnp.float32) + bflow)
        # Y[t] = h   (padded rows/steps are finite and sliced off in wrapper)
        y_ref[tt] = h_new
        if masked:
            # Freeze the carry on padded timesteps (T padded up to T_pad).
            valid = (t * tb + tt) < t_valid
            h_new = jnp.where(valid, h_new, h)
            c_new = jnp.where(valid, c_new, c)
        return h_new, c_new

    h, c = lax.fori_loop(0, tb, step, (h_sc[...], c_sc[...]), unroll=unroll)
    h_sc[...] = h
    c_sc[...] = c

    # out: last_output=True -> out(Y)[-1] == out(Y[T-1]) for a Linear head.
    # Written exactly once per batch block (its final time-grid step) before
    # that output block's writeback.
    @pl.when(t == pl.num_programs(1) - 1)
    def _():
        last_ref[...] = (
            jnp.dot(h, wout_sc[...], preferred_element_type=jnp.float32)
            + bout_ref[...])


def hybrid_neural_de(x, params, *, time_block=16, batch_block=None):
    """x: (T, B, D) float32. Returns (last_out (B, O), Y (T, B, H))."""
    T, B, D = x.shape
    w_ih, w_hh, b_ih, b_hh, w_flow, b_flow, w_out, b_out = params
    H = w_hh.shape[1]
    O = w_out.shape[0]

    # --- static tiling decisions ------------------------------------------
    tb = max(1, min(time_block, T))
    T_pad = ((T + tb - 1) // tb) * tb            # pad T, never shrink tb
    Bp = ((B + 7) // 8) * 8                      # pad batch to sublane group
    if batch_block is None:
        Bb = Bp                                  # v7x: pass Bp//2 to use 2 TCs
    else:
        Bb = max(8, (min(batch_block, Bp) // 8) * 8)
    Bp = ((Bp + Bb - 1) // Bb) * Bb              # make Bb divide Bp

    # --- weight prep (gate order [i, f, o, g], all pre-transposed) ---------
    perm = jnp.array([0, 1, 3, 2])               # PyTorch [i,f,g,o] -> [i,f,o,g]
    w_ih_g = w_ih.reshape(4, H, D)[perm]         # (4, H, D)
    w_hh_g = w_hh.reshape(4, H, H)[perm]         # (4, H, H)
    bias_g = (b_ih + b_hh).reshape(4, H)[perm]   # (4, H)

    # Fused recurrent weight: z = h @ whh_all, columns grouped [i|f|o|g].
    whh_all = jnp.transpose(w_hh_g, (2, 0, 1)).reshape(H, 4 * H)

    # Hoisted, gate-packed input projection with both LSTM biases folded in.
    xproj = (jnp.einsum('tbd,ghd->tbgh', x, w_ih_g).reshape(T, B, 4 * H)
             + bias_g.reshape(4 * H))
    xproj = jnp.pad(xproj, ((0, T_pad - T), (0, Bp - B), (0, 0)))  # (T_pad,Bp,4H)

    wflow_T = w_flow.T                           # (H, H)
    wout_T = w_out.T                             # (H, O)

    # --- VMEM budget / compiler params --------------------------------------
    f32 = 4
    vmem_need = (
        2 * tb * Bb * 4 * H * f32                # xproj slab (double-buffered)
        + 2 * tb * Bb * H * f32                  # Y slab
        + 2 * Bb * O * f32                       # last-output block
        + (H * 4 * H + H * H + H * O) * f32      # single-buffered weights
        + 2 * Bb * H * f32                       # h, c carry
        + (H + O) * f32)                         # biases
    vmem_limit = int(min(48 * 1024 * 1024,       # fits v7x's 64 MiB per TC
                         max(32 * 1024 * 1024, 2 * vmem_need)))

    kernel = functools.partial(
        _hybrid_kernel,
        t_valid=T, masked=(T_pad != T), unroll=min(tb, 8))

    y, last = pl.pallas_call(
        kernel,
        out_shape=(jax.ShapeDtypeStruct((T_pad, Bp, H), jnp.float32),
                   jax.ShapeDtypeStruct((Bp, O), jnp.float32)),
        grid_spec=pltpu.PrefetchScalarGridSpec(
            num_scalar_prefetch=0,
            grid=(Bp // Bb, T_pad // tb),        # (batch parallel, time seq.)
            in_specs=[
                pl.BlockSpec((tb, Bb, 4 * H), lambda b, t: (t, b, 0)),  # xproj
                pl.BlockSpec(memory_space=pl.ANY),   # whh_all  (HBM, copied once)
                pl.BlockSpec(memory_space=pl.ANY),   # wflow_T
                pl.BlockSpec(memory_space=pl.ANY),   # wout_T
                pl.BlockSpec((1, H), lambda b, t: (0, 0)),   # b_flow
                pl.BlockSpec((1, O), lambda b, t: (0, 0)),   # b_out
            ],
            out_specs=[
                pl.BlockSpec((tb, Bb, H), lambda b, t: (t, b, 0)),   # Y
                pl.BlockSpec((Bb, O), lambda b, t: (b, 0)),          # out(Y)[-1]
            ],
            scratch_shapes=[
                pltpu.VMEM((H, 4 * H), jnp.float32),  # whh_all (single-buffered)
                pltpu.VMEM((H, H), jnp.float32),      # wflow
                pltpu.VMEM((H, O), jnp.float32),      # wout
                pltpu.VMEM((Bb, H), jnp.float32),     # h carry
                pltpu.VMEM((Bb, H), jnp.float32),     # c carry
                pltpu.SemaphoreType.DMA((3,)),        # weight-copy semaphores
            ]),
        compiler_params=pltpu.CompilerParams(
            dimension_semantics=("parallel", "arbitrary"),
            vmem_limit_bytes=vmem_limit),
    )(xproj, whh_all, wflow_T, wout_T, b_flow, b_out)

    return last[:B], y[:T, :B]


def _reference(x, params):
    """Pure-JAX reference of the same forward pass (PyTorch gate order)."""
    w_ih, w_hh, b_ih, b_hh, w_flow, b_flow, w_out, b_out = params
    T, B, D = x.shape
    H = w_hh.shape[1]

    def step(carry, x_t):
        h, c = carry
        gates = x_t @ w_ih.T + h @ w_hh.T + b_ih[0] + b_hh[0]
        i = jax.nn.sigmoid(gates[:, 0 * H:1 * H])
        f = jax.nn.sigmoid(gates[:, 1 * H:2 * H])
        g = jnp.tanh(gates[:, 2 * H:3 * H])
        o = jax.nn.sigmoid(gates[:, 3 * H:4 * H])
        c = f * c + i * g
        h = o * jnp.tanh(c)
        h = jnp.tanh(h @ w_flow.T + b_flow[0])
        return (h, c), h

    h0 = jnp.zeros((B, H), jnp.float32)
    (_, _), Y = jax.lax.scan(step, (h0, h0), x)
    return Y[-1] @ w_out.T + b_out[0], Y


if __name__ == "__main__":
    T, B, D, H, O = 8, 2, 4, 32, 8  # seq, batch, input, hidden, out dims

    key = jax.random.PRNGKey(0)
    ks = jax.random.split(key, 9)
    scale = 1.0 / jnp.sqrt(H)
    params = (
        jax.random.uniform(ks[0], (4 * H, D), jnp.float32, -scale, scale),  # w_ih
        jax.random.uniform(ks[1], (4 * H, H), jnp.float32, -scale, scale),  # w_hh
        jax.random.uniform(ks[2], (1, 4 * H), jnp.float32, -scale, scale),  # b_ih
        jax.random.uniform(ks[3], (1, 4 * H), jnp.float32, -scale, scale),  # b_hh
        jax.random.uniform(ks[4], (H, H), jnp.float32, -scale, scale),      # w_flow
        jax.random.uniform(ks[5], (1, H), jnp.float32, -scale, scale),      # b_flow
        jax.random.uniform(ks[6], (O, H), jnp.float32, -scale, scale),      # w_out
        jax.random.uniform(ks[7], (1, O), jnp.float32, -scale, scale),      # b_out
    )
    x = jax.random.normal(ks[8], (T, B, D), jnp.float32)

    ref_last, ref_y = _reference(x, params)

    # Default tiling (T divides the time block -> no padding path).
    last, y = hybrid_neural_de(x, params)
    jax.block_until_ready((last, y))
    assert jnp.allclose(last, ref_last, atol=1e-5, rtol=1e-5)
    assert jnp.allclose(y, ref_y, atol=1e-5, rtol=1e-5)

    # Non-divisible time block -> exercises the padded / masked-carry path.
    last2, y2 = hybrid_neural_de(x, params, time_block=3)
    jax.block_until_ready((last2, y2))
    assert jnp.allclose(last2, ref_last, atol=1e-5, rtol=1e-5)
    assert jnp.allclose(y2, ref_y, atol=1e-5, rtol=1e-5)

    print("KERNEL_OK")
</pallas_src>

<mosaic_0001>
module attributes {stable_mosaic.version = 11 : i64} {
  func.func @_hybrid_kernel(%arg0: i32, %arg1: i32, %arg2: memref<8x8x128xf32, #tpu.memory_space<vmem>>, %arg3: memref<32x128xf32, #tpu.memory_space<any>>, %arg4: memref<32x32xf32, #tpu.memory_space<any>>, %arg5: memref<32x8xf32, #tpu.memory_space<any>>, %arg6: memref<1x32xf32, #tpu.memory_space<vmem>>, %arg7: memref<1x8xf32, #tpu.memory_space<vmem>>, %arg8: memref<8x8x32xf32, #tpu.memory_space<vmem>>, %arg9: memref<8x8xf32, #tpu.memory_space<vmem>>, %arg10: memref<32x128xf32, #tpu.memory_space<vmem>>, %arg11: memref<32x32xf32, #tpu.memory_space<vmem>>, %arg12: memref<32x8xf32, #tpu.memory_space<vmem>>, %arg13: memref<8x32xf32, #tpu.memory_space<vmem>>, %arg14: memref<8x32xf32, #tpu.memory_space<vmem>>, %arg15: memref<3x!tpu.dma_semaphore, #tpu.memory_space<semaphore_mem>>) attributes {dimension_semantics = [#tpu.dimension_semantics<parallel>, #tpu.dimension_semantics<arbitrary>], iteration_bounds = array<i64: 1, 1>, scalar_prefetch = 0 : i64, scratch_operands = 6 : i64, tpu.core_type = #tpu.core_type<tc>, window_params = [{transform_indices = @transform_0, window_bounds = array<i64: 8, 8, 128>}, {}, {}, {}, {pipeline_mode = #tpu.pipeline_mode<synchronous>, transform_indices = @transform_4, window_bounds = array<i64: 1, 32>}, {pipeline_mode = #tpu.pipeline_mode<synchronous>, transform_indices = @transform_5, window_bounds = array<i64: 1, 8>}, {transform_indices = @transform_6, window_bounds = array<i64: 8, 8, 32>}, {transform_indices = @transform_7, window_bounds = array<i64: 8, 8>}]} {
    %c0_i32 = arith.constant 0 : i32
    %0 = arith.cmpi eq, %arg1, %c0_i32 : i32
    %1 = arith.extui %0 : i1 to i32
    %c0_i32_0 = arith.constant 0 : i32
    %2 = arith.cmpi ne, %1, %c0_i32_0 : i32
    scf.if %2 {
      %c0_i32_72 = arith.constant 0 : i32
      %245 = tpu.memref_slice %arg15[%c0_i32_72] : memref<3x!tpu.dma_semaphore, #tpu.memory_space<semaphore_mem>> -> memref<1x!tpu.dma_semaphore, #tpu.memory_space<semaphore_mem>>
      %246 = tpu.memref_squeeze %245 : memref<1x!tpu.dma_semaphore, #tpu.memory_space<semaphore_mem>> -> memref<!tpu.dma_semaphore, #tpu.memory_space<semaphore_mem>>
      tpu.enqueue_dma source(%arg3 : memref<32x128xf32, #tpu.memory_space<any>>) target(%arg10 : memref<32x128xf32, #tpu.memory_space<vmem>>) target_semaphore(%246 : memref<!tpu.dma_semaphore, #tpu.memory_space<semaphore_mem>>)
      %c1_i32_73 = arith.constant 1 : i32
      %247 = tpu.memref_slice %arg15[%c1_i32_73] : memref<3x!tpu.dma_semaphore, #tpu.memory_space<semaphore_mem>> -> memref<1x!tpu.dma_semaphore, #tpu.memory_space<semaphore_mem>>
      %248 = tpu.memref_squeeze %247 : memref<1x!tpu.dma_semaphore, #tpu.memory_space<semaphore_mem>> -> memref<!tpu.dma_semaphore, #tpu.memory_space<semaphore_mem>>
      tpu.enqueue_dma source(%arg4 : memref<32x32xf32, #tpu.memory_space<any>>) target(%arg11 : memref<32x32xf32, #tpu.memory_space<vmem>>) target_semaphore(%248 : memref<!tpu.dma_semaphore, #tpu.memory_space<semaphore_mem>>)
      %c2_i32_74 = arith.constant 2 : i32
      %249 = tpu.memref_slice %arg15[%c2_i32_74] : memref<3x!tpu.dma_semaphore, #tpu.memory_space<semaphore_mem>> -> memref<1x!tpu.dma_semaphore, #tpu.memory_space<semaphore_mem>>
      %250 = tpu.memref_squeeze %249 : memref<1x!tpu.dma_semaphore, #tpu.memory_space<semaphore_mem>> -> memref<!tpu.dma_semaphore, #tpu.memory_space<semaphore_mem>>
      tpu.enqueue_dma source(%arg5 : memref<32x8xf32, #tpu.memory_space<any>>) target(%arg12 : memref<32x8xf32, #tpu.memory_space<vmem>>) target_semaphore(%250 : memref<!tpu.dma_semaphore, #tpu.memory_space<semaphore_mem>>)
      %cst_75 = arith.constant 0.000000e+00 : f32
      %251 = vector.broadcast %cst_75 : f32 to vector<8x32xf32>
      %c0_76 = arith.constant 0 : index
      %c0_77 = arith.constant 0 : index
      %252 = vector.load %arg13[%c0_76, %c0_77] : memref<8x32xf32, #tpu.memory_space<vmem>>, vector<8x32xf32>
      tpu.vector_store %arg13[%c0_76, %c0_77], %251 {strides = array<i32>} : memref<8x32xf32, #tpu.memory_space<vmem>>, vector<8x32xf32>,
      %cst_78 = arith.constant 0.000000e+00 : f32
      %253 = vector.broadcast %cst_78 : f32 to vector<8x32xf32>
      %c0_79 = arith.constant 0 : index
      %c0_80 = arith.constant 0 : index
      %254 = vector.load %arg14[%c0_79, %c0_80] : memref<8x32xf32, #tpu.memory_space<vmem>>, vector<8x32xf32>
      tpu.vector_store %arg14[%c0_79, %c0_80], %253 {strides = array<i32>} : memref<8x32xf32, #tpu.memory_space<vmem>>, vector<8x32xf32>,
      %c0_i32_81 = arith.constant 0 : i32
      %255 = tpu.memref_slice %arg15[%c0_i32_81] : memref<3x!tpu.dma_semaphore, #tpu.memory_space<semaphore_mem>> -> memref<1x!tpu.dma_semaphore, #tpu.memory_space<semaphore_mem>>
      %256 = tpu.memref_squeeze %255 : memref<1x!tpu.dma_semaphore, #tpu.memory_space<semaphore_mem>> -> memref<!tpu.dma_semaphore, #tpu.memory_space<semaphore_mem>>
      tpu.wait_dma2 semaphore(%256 : memref<!tpu.dma_semaphore, #tpu.memory_space<semaphore_mem>>) src(%arg3 : memref<32x128xf32, #tpu.memory_space<any>>) dst(%arg10 : memref<32x128xf32, #tpu.memory_space<vmem>>)
      %c1_i32_82 = arith.constant 1 : i32
      %257 = tpu.memref_slice %arg15[%c1_i32_82] : memref<3x!tpu.dma_semaphore, #tpu.memory_space<semaphore_mem>> -> memref<1x!tpu.dma_semaphore, #tpu.memory_space<semaphore_mem>>
      %258 = tpu.memref_squeeze %257 : memref<1x!tpu.dma_semaphore, #tpu.memory_space<semaphore_mem>> -> memref<!tpu.dma_semaphore, #tpu.memory_space<semaphore_mem>>
      tpu.wait_dma2 semaphore(%258 : memref<!tpu.dma_semaphore, #tpu.memory_space<semaphore_mem>>) src(%arg4 : memref<32x32xf32, #tpu.memory_space<any>>) dst(%arg11 : memref<32x32xf32, #tpu.memory_space<vmem>>)
      %c2_i32_83 = arith.constant 2 : i32
      %259 = tpu.memref_slice %arg15[%c2_i32_83] : memref<3x!tpu.dma_semaphore, #tpu.memory_space<semaphore_mem>> -> memref<1x!tpu.dma_semaphore, #tpu.memory_space<semaphore_mem>>
      %260 = tpu.memref_squeeze %259 : memref<1x!tpu.dma_semaphore, #tpu.memory_space<semaphore_mem>> -> memref<!tpu.dma_semaphore, #tpu.memory_space<semaphore_mem>>
      tpu.wait_dma2 semaphore(%260 : memref<!tpu.dma_semaphore, #tpu.memory_space<semaphore_mem>>) src(%arg5 : memref<32x8xf32, #tpu.memory_space<any>>) dst(%arg12 : memref<32x8xf32, #tpu.memory_space<vmem>>)
    } else {
    }
    %c0 = arith.constant 0 : index
    %c0_1 = arith.constant 0 : index
    %3 = vector.load %arg10[%c0, %c0_1] : memref<32x128xf32, #tpu.memory_space<vmem>>, vector<32x128xf32>
    %c0_2 = arith.constant 0 : index
    %c0_3 = arith.constant 0 : index
    %4 = vector.load %arg11[%c0_2, %c0_3] : memref<32x32xf32, #tpu.memory_space<vmem>>, vector<32x32xf32>
    %c0_4 = arith.constant 0 : index
    %c0_5 = arith.constant 0 : index
    %5 = vector.load %arg6[%c0_4, %c0_5] : memref<1x32xf32, #tpu.memory_space<vmem>>, vector<1x32xf32>
    %c0_6 = arith.constant 0 : index
    %c0_7 = arith.constant 0 : index
    %6 = vector.load %arg13[%c0_6, %c0_7] : memref<8x32xf32, #tpu.memory_space<vmem>>, vector<8x32xf32>
    %c0_8 = arith.constant 0 : index
    %c0_9 = arith.constant 0 : index
    %7 = vector.load %arg14[%c0_8, %c0_9] : memref<8x32xf32, #tpu.memory_space<vmem>>, vector<8x32xf32>
    %c0_i32_10 = arith.constant 0 : i32
    %8 = arith.index_cast %c0_i32_10 : i32 to index
    %c0_11 = arith.constant 0 : index
    %c0_12 = arith.constant 0 : index
    %9 = vector.load %arg2[%8, %c0_11, %c0_12] : memref<8x8x128xf32, #tpu.memory_space<vmem>>, vector<1x8x128xf32>
    %10 = vector.shape_cast %9 : vector<1x8x128xf32> to vector<8x128xf32>
    %cst = arith.constant dense<0.000000e+00> : vector<8x128xf32>
    %11 = tpu.matmul %6, %3, %cst {dimension_numbers = #tpu.dot_dimension_numbers<[1], [0], [0], [1], [0, 0, 1, 1], [], []>} : vector<8x32xf32>, vector<32x128xf32>, vector<8x128xf32> -> vector<8x128xf32>
    %12 = arith.addf %10, %11 : vector<8x128xf32>
    %13 = vector.extract_strided_slice %12 {offsets = [0, 0], sizes = [8, 96], strides = [1, 1]} : vector<8x128xf32> to vector<8x96xf32>
    %14 = arith.negf %13 : vector<8x96xf32>
    %15 = math.exp %14 : vector<8x96xf32>
    %cst_13 = arith.constant 1.000000e+00 : f32
    %16 = vector.broadcast %cst_13 : f32 to vector<8x96xf32>
    %17 = arith.addf %16, %15 : vector<8x96xf32>
    %18 = arith.divf %16, %17 : vector<8x96xf32>
    %19 = vector.extract_strided_slice %18 {offsets = [0, 0], sizes = [8, 32], strides = [1, 1]} : vector<8x96xf32> to vector<8x32xf32>
    %20 = vector.extract_strided_slice %18 {offsets = [0, 32], sizes = [8, 32], strides = [1, 1]} : vector<8x96xf32> to vector<8x32xf32>
    %21 = vector.extract_strided_slice %18 {offsets = [0, 64], sizes = [8, 32], strides = [1, 1]} : vector<8x96xf32> to vector<8x32xf32>
    %22 = vector.extract_strided_slice %12 {offsets = [0, 96], sizes = [8, 32], strides = [1, 1]} : vector<8x128xf32> to vector<8x32xf32>
    %23 = math.tanh %22 : vector<8x32xf32>
    %24 = arith.mulf %20, %7 : vector<8x32xf32>
    %25 = arith.mulf %19, %23 : vector<8x32xf32>
    %26 = arith.addf %24, %25 : vector<8x32xf32>
    %27 = math.tanh %26 : vector<8x32xf32>
    %28 = arith.mulf %21, %27 : vector<8x32xf32>
    %cst_14 = arith.constant dense<0.000000e+00> : vector<8x32xf32>
    %29 = tpu.matmul %28, %4, %cst_14 {dimension_numbers = #tpu.dot_dimension_numbers<[1], [0], [0], [1], [0, 0, 1, 1], [], []>} : vector<8x32xf32>, vector<32x32xf32>, vector<8x32xf32> -> vector<8x32xf32>
    %30 = vector.broadcast %5 : vector<1x32xf32> to vector<8x32xf32>
    %31 = arith.addf %29, %30 : vector<8x32xf32>
    %32 = math.tanh %31 : vector<8x32xf32>
    %33 = arith.index_cast %c0_i32_10 : i32 to index
    %c0_15 = arith.constant 0 : index
    %c0_16 = arith.constant 0 : index
    %34 = vector.load %arg8[%33, %c0_15, %c0_16] : memref<8x8x32xf32, #tpu.memory_space<vmem>>, vector<1x8x32xf32>
    %35 = vector.shape_cast %34 : vector<1x8x32xf32> to vector<8x32xf32>
    %36 = vector.shape_cast %32 : vector<8x32xf32> to vector<1x8x32xf32>
    tpu.vector_store %arg8[%33, %c0_15, %c0_16], %36 {strides = array<i32>} : memref<8x8x32xf32, #tpu.memory_space<vmem>>, vector<1x8x32xf32>,
    %c1_i32 = arith.constant 1 : i32
    %37 = arith.index_cast %c1_i32 : i32 to index
    %c0_17 = arith.constant 0 : index
    %c0_18 = arith.constant 0 : index
    %38 = vector.load %arg2[%37, %c0_17, %c0_18] : memref<8x8x128xf32, #tpu.memory_space<vmem>>, vector<1x8x128xf32>
    %39 = vector.shape_cast %38 : vector<1x8x128xf32> to vector<8x128xf32>
    %cst_19 = arith.constant dense<0.000000e+00> : vector<8x128xf32>
    %40 = tpu.matmul %32, %3, %cst_19 {dimension_numbers = #tpu.dot_dimension_numbers<[1], [0], [0], [1], [0, 0, 1, 1], [], []>} : vector<8x32xf32>, vector<32x128xf32>, vector<8x128xf32> -> vector<8x128xf32>
    %41 = arith.addf %39, %40 : vector<8x128xf32>
    %42 = vector.extract_strided_slice %41 {offsets = [0, 0], sizes = [8, 96], strides = [1, 1]} : vector<8x128xf32> to vector<8x96xf32>
    %43 = arith.negf %42 : vector<8x96xf32>
    %44 = math.exp %43 : vector<8x96xf32>
    %cst_20 = arith.constant 1.000000e+00 : f32
    %45 = vector.broadcast %cst_20 : f32 to vector<8x96xf32>
    %46 = arith.addf %45, %44 : vector<8x96xf32>
    %47 = arith.divf %45, %46 : vector<8x96xf32>
    %48 = vector.extract_strided_slice %47 {offsets = [0, 0], sizes = [8, 32], strides = [1, 1]} : vector<8x96xf32> to vector<8x32xf32>
    %49 = vector.extract_strided_slice %47 {offsets = [0, 32], sizes = [8, 32], strides = [1, 1]} : vector<8x96xf32> to vector<8x32xf32>
    %50 = vector.extract_strided_slice %47 {offsets = [0, 64], sizes = [8, 32], strides = [1, 1]} : vector<8x96xf32> to vector<8x32xf32>
    %51 = vector.extract_strided_slice %41 {offsets = [0, 96], sizes = [8, 32], strides = [1, 1]} : vector<8x128xf32> to vector<8x32xf32>
    %52 = math.tanh %51 : vector<8x32xf32>
    %53 = arith.mulf %49, %26 : vector<8x32xf32>
    %54 = arith.mulf %48, %52 : vector<8x32xf32>
    %55 = arith.addf %53, %54 : vector<8x32xf32>
    %56 = math.tanh %55 : vector<8x32xf32>
    %57 = arith.mulf %50, %56 : vector<8x32xf32>
    %cst_21 = arith.constant dense<0.000000e+00> : vector<8x32xf32>
    %58 = tpu.matmul %57, %4, %cst_21 {dimension_numbers = #tpu.dot_dimension_numbers<[1], [0], [0], [1], [0, 0, 1, 1], [], []>} : vector<8x32xf32>, vector<32x32xf32>, vector<8x32xf32> -> vector<8x32xf32>
    %59 = vector.broadcast %5 : vector<1x32xf32> to vector<8x32xf32>
    %60 = arith.addf %58, %59 : vector<8x32xf32>
    %61 = math.tanh %60 : vector<8x32xf32>
    %62 = arith.index_cast %c1_i32 : i32 to index
    %c0_22 = arith.constant 0 : index
    %c0_23 = arith.constant 0 : index
    %63 = vector.load %arg8[%62, %c0_22, %c0_23] : memref<8x8x32xf32, #tpu.memory_space<vmem>>, vector<1x8x32xf32>
    %64 = vector.shape_cast %63 : vector<1x8x32xf32> to vector<8x32xf32>
    %65 = vector.shape_cast %61 : vector<8x32xf32> to vector<1x8x32xf32>
    tpu.vector_store %arg8[%62, %c0_22, %c0_23], %65 {strides = array<i32>} : memref<8x8x32xf32, #tpu.memory_space<vmem>>, vector<1x8x32xf32>,
    %c2_i32 = arith.constant 2 : i32
    %66 = arith.index_cast %c2_i32 : i32 to index
    %c0_24 = arith.constant 0 : index
    %c0_25 = arith.constant 0 : index
    %67 = vector.load %arg2[%66, %c0_24, %c0_25] : memref<8x8x128xf32, #tpu.memory_space<vmem>>, vector<1x8x128xf32>
    %68 = vector.shape_cast %67 : vector<1x8x128xf32> to vector<8x128xf32>
    %cst_26 = arith.constant dense<0.000000e+00> : vector<8x128xf32>
    %69 = tpu.matmul %61, %3, %cst_26 {dimension_numbers = #tpu.dot_dimension_numbers<[1], [0], [0], [1], [0, 0, 1, 1], [], []>} : vector<8x32xf32>, vector<32x128xf32>, vector<8x128xf32> -> vector<8x128xf32>
    %70 = arith.addf %68, %69 : vector<8x128xf32>
    %71 = vector.extract_strided_slice %70 {offsets = [0, 0], sizes = [8, 96], strides = [1, 1]} : vector<8x128xf32> to vector<8x96xf32>
    %72 = arith.negf %71 : vector<8x96xf32>
    %73 = math.exp %72 : vector<8x96xf32>
    %cst_27 = arith.constant 1.000000e+00 : f32
    %74 = vector.broadcast %cst_27 : f32 to vector<8x96xf32>
    %75 = arith.addf %74, %73 : vector<8x96xf32>
    %76 = arith.divf %74, %75 : vector<8x96xf32>
    %77 = vector.extract_strided_slice %76 {offsets = [0, 0], sizes = [8, 32], strides = [1, 1]} : vector<8x96xf32> to vector<8x32xf32>
    %78 = vector.extract_strided_slice %76 {offsets = [0, 32], sizes = [8, 32], strides = [1, 1]} : vector<8x96xf32> to vector<8x32xf32>
    %79 = vector.extract_strided_slice %76 {offsets = [0, 64], sizes = [8, 32], strides = [1, 1]} : vector<8x96xf32> to vector<8x32xf32>
    %80 = vector.extract_strided_slice %70 {offsets = [0, 96], sizes = [8, 32], strides = [1, 1]} : vector<8x128xf32> to vector<8x32xf32>
    %81 = math.tanh %80 : vector<8x32xf32>
    %82 = arith.mulf %78, %55 : vector<8x32xf32>
    %83 = arith.mulf %77, %81 : vector<8x32xf32>
    %84 = arith.addf %82, %83 : vector<8x32xf32>
    %85 = math.tanh %84 : vector<8x32xf32>
    %86 = arith.mulf %79, %85 : vector<8x32xf32>
    %cst_28 = arith.constant dense<0.000000e+00> : vector<8x32xf32>
    %87 = tpu.matmul %86, %4, %cst_28 {dimension_numbers = #tpu.dot_dimension_numbers<[1], [0], [0], [1], [0, 0, 1, 1], [], []>} : vector<8x32xf32>, vector<32x32xf32>, vector<8x32xf32> -> vector<8x32xf32>
    %88 = vector.broadcast %5 : vector<1x32xf32> to vector<8x32xf32>
    %89 = arith.addf %87, %88 : vector<8x32xf32>
    %90 = math.tanh %89 : vector<8x32xf32>
    %91 = arith.index_cast %c2_i32 : i32 to index
    %c0_29 = arith.constant 0 : index
    %c0_30 = arith.constant 0 : index
    %92 = vector.load %arg8[%91, %c0_29, %c0_30] : memref<8x8x32xf32, #tpu.memory_space<vmem>>, vector<1x8x32xf32>
    %93 = vector.shape_cast %92 : vector<1x8x32xf32> to vector<8x32xf32>
    %94 = vector.shape_cast %90 : vector<8x32xf32> to vector<1x8x32xf32>
    tpu.vector_store %arg8[%91, %c0_29, %c0_30], %94 {strides = array<i32>} : memref<8x8x32xf32, #tpu.memory_space<vmem>>, vector<1x8x32xf32>,
    %c3_i32 = arith.constant 3 : i32
    %95 = arith.index_cast %c3_i32 : i32 to index
    %c0_31 = arith.constant 0 : index
    %c0_32 = arith.constant 0 : index
    %96 = vector.load %arg2[%95, %c0_31, %c0_32] : memref<8x8x128xf32, #tpu.memory_space<vmem>>, vector<1x8x128xf32>
    %97 = vector.shape_cast %96 : vector<1x8x128xf32> to vector<8x128xf32>
    %cst_33 = arith.constant dense<0.000000e+00> : vector<8x128xf32>
    %98 = tpu.matmul %90, %3, %cst_33 {dimension_numbers = #tpu.dot_dimension_numbers<[1], [0], [0], [1], [0, 0, 1, 1], [], []>} : vector<8x32xf32>, vector<32x128xf32>, vector<8x128xf32> -> vector<8x128xf32>
    %99 = arith.addf %97, %98 : vector<8x128xf32>
    %100 = vector.extract_strided_slice %99 {offsets = [0, 0], sizes = [8, 96], strides = [1, 1]} : vector<8x128xf32> to vector<8x96xf32>
    %101 = arith.negf %100 : vector<8x96xf32>
    %102 = math.exp %101 : vector<8x96xf32>
    %cst_34 = arith.constant 1.000000e+00 : f32
    %103 = vector.broadcast %cst_34 : f32 to vector<8x96xf32>
    %104 = arith.addf %103, %102 : vector<8x96xf32>
    %105 = arith.divf %103, %104 : vector<8x96xf32>
    %106 = vector.extract_strided_slice %105 {offsets = [0, 0], sizes = [8, 32], strides = [1, 1]} : vector<8x96xf32> to vector<8x32xf32>
    %107 = vector.extract_strided_slice %105 {offsets = [0, 32], sizes = [8, 32], strides = [1, 1]} : vector<8x96xf32> to vector<8x32xf32>
    %108 = vector.extract_strided_slice %105 {offsets = [0, 64], sizes = [8, 32], strides = [1, 1]} : vector<8x96xf32> to vector<8x32xf32>
    %109 = vector.extract_strided_slice %99 {offsets = [0, 96], sizes = [8, 32], strides = [1, 1]} : vector<8x128xf32> to vector<8x32xf32>
    %110 = math.tanh %109 : vector<8x32xf32>
    %111 = arith.mulf %107, %84 : vector<8x32xf32>
    %112 = arith.mulf %106, %110 : vector<8x32xf32>
    %113 = arith.addf %111, %112 : vector<8x32xf32>
    %114 = math.tanh %113 : vector<8x32xf32>
    %115 = arith.mulf %108, %114 : vector<8x32xf32>
    %cst_35 = arith.constant dense<0.000000e+00> : vector<8x32xf32>
    %116 = tpu.matmul %115, %4, %cst_35 {dimension_numbers = #tpu.dot_dimension_numbers<[1], [0], [0], [1], [0, 0, 1, 1], [], []>} : vector<8x32xf32>, vector<32x32xf32>, vector<8x32xf32> -> vector<8x32xf32>
    %117 = vector.broadcast %5 : vector<1x32xf32> to vector<8x32xf32>
    %118 = arith.addf %116, %117 : vector<8x32xf32>
    %119 = math.tanh %118 : vector<8x32xf32>
    %120 = arith.index_cast %c3_i32 : i32 to index
    %c0_36 = arith.constant 0 : index
    %c0_37 = arith.constant 0 : index
    %121 = vector.load %arg8[%120, %c0_36, %c0_37] : memref<8x8x32xf32, #tpu.memory_space<vmem>>, vector<1x8x32xf32>
    %122 = vector.shape_cast %121 : vector<1x8x32xf32> to vector<8x32xf32>
    %123 = vector.shape_cast %119 : vector<8x32xf32> to vector<1x8x32xf32>
    tpu.vector_store %arg8[%120, %c0_36, %c0_37], %123 {strides = array<i32>} : memref<8x8x32xf32, #tpu.memory_space<vmem>>, vector<1x8x32xf32>,
    %c4_i32 = arith.constant 4 : i32
    %124 = arith.index_cast %c4_i32 : i32 to index
    %c0_38 = arith.constant 0 : index
    %c0_39 = arith.constant 0 : index
    %125 = vector.load %arg2[%124, %c0_38, %c0_39] : memref<8x8x128xf32, #tpu.memory_space<vmem>>, vector<1x8x128xf32>
    %126 = vector.shape_cast %125 : vector<1x8x128xf32> to vector<8x128xf32>
    %cst_40 = arith.constant dense<0.000000e+00> : vector<8x128xf32>
    %127 = tpu.matmul %119, %3, %cst_40 {dimension_numbers = #tpu.dot_dimension_numbers<[1], [0], [0], [1], [0, 0, 1, 1], [], []>} : vector<8x32xf32>, vector<32x128xf32>, vector<8x128xf32> -> vector<8x128xf32>
    %128 = arith.addf %126, %127 : vector<8x128xf32>
    %129 = vector.extract_strided_slice %128 {offsets = [0, 0], sizes = [8, 96], strides = [1, 1]} : vector<8x128xf32> to vector<8x96xf32>
    %130 = arith.negf %129 : vector<8x96xf32>
    %131 = math.exp %130 : vector<8x96xf32>
    %cst_41 = arith.constant 1.000000e+00 : f32
    %132 = vector.broadcast %cst_41 : f32 to vector<8x96xf32>
    %133 = arith.addf %132, %131 : vector<8x96xf32>
    %134 = arith.divf %132, %133 : vector<8x96xf32>
    %135 = vector.extract_strided_slice %134 {offsets = [0, 0], sizes = [8, 32], strides = [1, 1]} : vector<8x96xf32> to vector<8x32xf32>
    %136 = vector.extract_strided_slice %134 {offsets = [0, 32], sizes = [8, 32], strides = [1, 1]} : vector<8x96xf32> to vector<8x32xf32>
    %137 = vector.extract_strided_slice %134 {offsets = [0, 64], sizes = [8, 32], strides = [1, 1]} : vector<8x96xf32> to vector<8x32xf32>
    %138 = vector.extract_strided_slice %128 {offsets = [0, 96], sizes = [8, 32], strides = [1, 1]} : vector<8x128xf32> to vector<8x32xf32>
    %139 = math.tanh %138 : vector<8x32xf32>
    %140 = arith.mulf %136, %113 : vector<8x32xf32>
    %141 = arith.mulf %135, %139 : vector<8x32xf32>
    %142 = arith.addf %140, %141 : vector<8x32xf32>
    %143 = math.tanh %142 : vector<8x32xf32>
    %144 = arith.mulf %137, %143 : vector<8x32xf32>
    %cst_42 = arith.constant dense<0.000000e+00> : vector<8x32xf32>
    %145 = tpu.matmul %144, %4, %cst_42 {dimension_numbers = #tpu.dot_dimension_numbers<[1], [0], [0], [1], [0, 0, 1, 1], [], []>} : vector<8x32xf32>, vector<32x32xf32>, vector<8x32xf32> -> vector<8x32xf32>
    %146 = vector.broadcast %5 : vector<1x32xf32> to vector<8x32xf32>
    %147 = arith.addf %145, %146 : vector<8x32xf32>
    %148 = math.tanh %147 : vector<8x32xf32>
    %149 = arith.index_cast %c4_i32 : i32 to index
    %c0_43 = arith.constant 0 : index
    %c0_44 = arith.constant 0 : index
    %150 = vector.load %arg8[%149, %c0_43, %c0_44] : memref<8x8x32xf32, #tpu.memory_space<vmem>>, vector<1x8x32xf32>
    %151 = vector.shape_cast %150 : vector<1x8x32xf32> to vector<8x32xf32>
    %152 = vector.shape_cast %148 : vector<8x32xf32> to vector<1x8x32xf32>
    tpu.vector_store %arg8[%149, %c0_43, %c0_44], %152 {strides = array<i32>} : memref<8x8x32xf32, #tpu.memory_space<vmem>>, vector<1x8x32xf32>,
    %c5_i32 = arith.constant 5 : i32
    %153 = arith.index_cast %c5_i32 : i32 to index
    %c0_45 = arith.constant 0 : index
    %c0_46 = arith.constant 0 : index
    %154 = vector.load %arg2[%153, %c0_45, %c0_46] : memref<8x8x128xf32, #tpu.memory_space<vmem>>, vector<1x8x128xf32>
    %155 = vector.shape_cast %154 : vector<1x8x128xf32> to vector<8x128xf32>
    %cst_47 = arith.constant dense<0.000000e+00> : vector<8x128xf32>
    %156 = tpu.matmul %148, %3, %cst_47 {dimension_numbers = #tpu.dot_dimension_numbers<[1], [0], [0], [1], [0, 0, 1, 1], [], []>} : vector<8x32xf32>, vector<32x128xf32>, vector<8x128xf32> -> vector<8x128xf32>
    %157 = arith.addf %155, %156 : vector<8x128xf32>
    %158 = vector.extract_strided_slice %157 {offsets = [0, 0], sizes = [8, 96], strides = [1, 1]} : vector<8x128xf32> to vector<8x96xf32>
    %159 = arith.negf %158 : vector<8x96xf32>
    %160 = math.exp %159 : vector<8x96xf32>
    %cst_48 = arith.constant 1.000000e+00 : f32
    %161 = vector.broadcast %cst_48 : f32 to vector<8x96xf32>
    %162 = arith.addf %161, %160 : vector<8x96xf32>
    %163 = arith.divf %161, %162 : vector<8x96xf32>
    %164 = vector.extract_strided_slice %163 {offsets = [0, 0], sizes = [8, 32], strides = [1, 1]} : vector<8x96xf32> to vector<8x32xf32>
    %165 = vector.extract_strided_slice %163 {offsets = [0, 32], sizes = [8, 32], strides = [1, 1]} : vector<8x96xf32> to vector<8x32xf32>
    %166 = vector.extract_strided_slice %163 {offsets = [0, 64], sizes = [8, 32], strides = [1, 1]} : vector<8x96xf32> to vector<8x32xf32>
    %167 = vector.extract_strided_slice %157 {offsets = [0, 96], sizes = [8, 32], strides = [1, 1]} : vector<8x128xf32> to vector<8x32xf32>
    %168 = math.tanh %167 : vector<8x32xf32>
    %169 = arith.mulf %165, %142 : vector<8x32xf32>
    %170 = arith.mulf %164, %168 : vector<8x32xf32>
    %171 = arith.addf %169, %170 : vector<8x32xf32>
    %172 = math.tanh %171 : vector<8x32xf32>
    %173 = arith.mulf %166, %172 : vector<8x32xf32>
    %cst_49 = arith.constant dense<0.000000e+00> : vector<8x32xf32>
    %174 = tpu.matmul %173, %4, %cst_49 {dimension_numbers = #tpu.dot_dimension_numbers<[1], [0], [0], [1], [0, 0, 1, 1], [], []>} : vector<8x32xf32>, vector<32x32xf32>, vector<8x32xf32> -> vector<8x32xf32>
    %175 = vector.broadcast %5 : vector<1x32xf32> to vector<8x32xf32>
    %176 = arith.addf %174, %175 : vector<8x32xf32>
    %177 = math.tanh %176 : vector<8x32xf32>
    %178 = arith.index_cast %c5_i32 : i32 to index
    %c0_50 = arith.constant 0 : index
    %c0_51 = arith.constant 0 : index
    %179 = vector.load %arg8[%178, %c0_50, %c0_51] : memref<8x8x32xf32, #tpu.memory_space<vmem>>, vector<1x8x32xf32>
    %180 = vector.shape_cast %179 : vector<1x8x32xf32> to vector<8x32xf32>
    %181 = vector.shape_cast %177 : vector<8x32xf32> to vector<1x8x32xf32>
    tpu.vector_store %arg8[%178, %c0_50, %c0_51], %181 {strides = array<i32>} : memref<8x8x32xf32, #tpu.memory_space<vmem>>, vector<1x8x32xf32>,
    %c6_i32 = arith.constant 6 : i32
    %182 = arith.index_cast %c6_i32 : i32 to index
    %c0_52 = arith.constant 0 : index
    %c0_53 = arith.constant 0 : index
    %183 = vector.load %arg2[%182, %c0_52, %c0_53] : memref<8x8x128xf32, #tpu.memory_space<vmem>>, vector<1x8x128xf32>
    %184 = vector.shape_cast %183 : vector<1x8x128xf32> to vector<8x128xf32>
    %cst_54 = arith.constant dense<0.000000e+00> : vector<8x128xf32>
    %185 = tpu.matmul %177, %3, %cst_54 {dimension_numbers = #tpu.dot_dimension_numbers<[1], [0], [0], [1], [0, 0, 1, 1], [], []>} : vector<8x32xf32>, vector<32x128xf32>, vector<8x128xf32> -> vector<8x128xf32>
    %186 = arith.addf %184, %185 : vector<8x128xf32>
    %187 = vector.extract_strided_slice %186 {offsets = [0, 0], sizes = [8, 96], strides = [1, 1]} : vector<8x128xf32> to vector<8x96xf32>
    %188 = arith.negf %187 : vector<8x96xf32>
    %189 = math.exp %188 : vector<8x96xf32>
    %cst_55 = arith.constant 1.000000e+00 : f32
    %190 = vector.broadcast %cst_55 : f32 to vector<8x96xf32>
    %191 = arith.addf %190, %189 : vector<8x96xf32>
    %192 = arith.divf %190, %191 : vector<8x96xf32>
    %193 = vector.extract_strided_slice %192 {offsets = [0, 0], sizes = [8, 32], strides = [1, 1]} : vector<8x96xf32> to vector<8x32xf32>
    %194 = vector.extract_strided_slice %192 {offsets = [0, 32], sizes = [8, 32], strides = [1, 1]} : vector<8x96xf32> to vector<8x32xf32>
    %195 = vector.extract_strided_slice %192 {offsets = [0, 64], sizes = [8, 32], strides = [1, 1]} : vector<8x96xf32> to vector<8x32xf32>
    %196 = vector.extract_strided_slice %186 {offsets = [0, 96], sizes = [8, 32], strides = [1, 1]} : vector<8x128xf32> to vector<8x32xf32>
    %197 = math.tanh %196 : vector<8x32xf32>
    %198 = arith.mulf %194, %171 : vector<8x32xf32>
    %199 = arith.mulf %193, %197 : vector<8x32xf32>
    %200 = arith.addf %198, %199 : vector<8x32xf32>
    %201 = math.tanh %200 : vector<8x32xf32>
    %202 = arith.mulf %195, %201 : vector<8x32xf32>
    %cst_56 = arith.constant dense<0.000000e+00> : vector<8x32xf32>
    %203 = tpu.matmul %202, %4, %cst_56 {dimension_numbers = #tpu.dot_dimension_numbers<[1], [0], [0], [1], [0, 0, 1, 1], [], []>} : vector<8x32xf32>, vector<32x32xf32>, vector<8x32xf32> -> vector<8x32xf32>
    %204 = vector.broadcast %5 : vector<1x32xf32> to vector<8x32xf32>
    %205 = arith.addf %203, %204 : vector<8x32xf32>
    %206 = math.tanh %205 : vector<8x32xf32>
    %207 = arith.index_cast %c6_i32 : i32 to index
    %c0_57 = arith.constant 0 : index
    %c0_58 = arith.constant 0 : index
    %208 = vector.load %arg8[%207, %c0_57, %c0_58] : memref<8x8x32xf32, #tpu.memory_space<vmem>>, vector<1x8x32xf32>
    %209 = vector.shape_cast %208 : vector<1x8x32xf32> to vector<8x32xf32>
    %210 = vector.shape_cast %206 : vector<8x32xf32> to vector<1x8x32xf32>
    tpu.vector_store %arg8[%207, %c0_57, %c0_58], %210 {strides = array<i32>} : memref<8x8x32xf32, #tpu.memory_space<vmem>>, vector<1x8x32xf32>,
    %c7_i32 = arith.constant 7 : i32
    %211 = arith.index_cast %c7_i32 : i32 to index
    %c0_59 = arith.constant 0 : index
    %c0_60 = arith.constant 0 : index
    %212 = vector.load %arg2[%211, %c0_59, %c0_60] : memref<8x8x128xf32, #tpu.memory_space<vmem>>, vector<1x8x128xf32>
    %213 = vector.shape_cast %212 : vector<1x8x128xf32> to vector<8x128xf32>
    %cst_61 = arith.constant dense<0.000000e+00> : vector<8x128xf32>
    %214 = tpu.matmul %206, %3, %cst_61 {dimension_numbers = #tpu.dot_dimension_numbers<[1], [0], [0], [1], [0, 0, 1, 1], [], []>} : vector<8x32xf32>, vector<32x128xf32>, vector<8x128xf32> -> vector<8x128xf32>
    %215 = arith.addf %213, %214 : vector<8x128xf32>
    %216 = vector.extract_strided_slice %215 {offsets = [0, 0], sizes = [8, 96], strides = [1, 1]} : vector<8x128xf32> to vector<8x96xf32>
    %217 = arith.negf %216 : vector<8x96xf32>
    %218 = math.exp %217 : vector<8x96xf32>
    %cst_62 = arith.constant 1.000000e+00 : f32
    %219 = vector.broadcast %cst_62 : f32 to vector<8x96xf32>
    %220 = arith.addf %219, %218 : vector<8x96xf32>
    %221 = arith.divf %219, %220 : vector<8x96xf32>
    %222 = vector.extract_strided_slice %221 {offsets = [0, 0], sizes = [8, 32], strides = [1, 1]} : vector<8x96xf32> to vector<8x32xf32>
    %223 = vector.extract_strided_slice %221 {offsets = [0, 32], sizes = [8, 32], strides = [1, 1]} : vector<8x96xf32> to vector<8x32xf32>
    %224 = vector.extract_strided_slice %221 {offsets = [0, 64], sizes = [8, 32], strides = [1, 1]} : vector<8x96xf32> to vector<8x32xf32>
    %225 = vector.extract_strided_slice %215 {offsets = [0, 96], sizes = [8, 32], strides = [1, 1]} : vector<8x128xf32> to vector<8x32xf32>
    %226 = math.tanh %225 : vector<8x32xf32>
    %227 = arith.mulf %223, %200 : vector<8x32xf32>
    %228 = arith.mulf %222, %226 : vector<8x32xf32>
    %229 = arith.addf %227, %228 : vector<8x32xf32>
    %230 = math.tanh %229 : vector<8x32xf32>
    %231 = arith.mulf %224, %230 : vector<8x32xf32>
    %cst_63 = arith.constant dense<0.000000e+00> : vector<8x32xf32>
    %232 = tpu.matmul %231, %4, %cst_63 {dimension_numbers = #tpu.dot_dimension_numbers<[1], [0], [0], [1], [0, 0, 1, 1], [], []>} : vector<8x32xf32>, vector<32x32xf32>, vector<8x32xf32> -> vector<8x32xf32>
    %233 = vector.broadcast %5 : vector<1x32xf32> to vector<8x32xf32>
    %234 = arith.addf %232, %233 : vector<8x32xf32>
    %235 = math.tanh %234 : vector<8x32xf32>
    %236 = arith.index_cast %c7_i32 : i32 to index
    %c0_64 = arith.constant 0 : index
    %c0_65 = arith.constant 0 : index
    %237 = vector.load %arg8[%236, %c0_64, %c0_65] : memref<8x8x32xf32, #tpu.memory_space<vmem>>, vector<1x8x32xf32>
    %238 = vector.shape_cast %237 : vector<1x8x32xf32> to vector<8x32xf32>
    %239 = vector.shape_cast %235 : vector<8x32xf32> to vector<1x8x32xf32>
    tpu.vector_store %arg8[%236, %c0_64, %c0_65], %239 {strides = array<i32>} : memref<8x8x32xf32, #tpu.memory_space<vmem>>, vector<1x8x32xf32>,
    %c8_i32 = arith.constant 8 : i32
    %c0_66 = arith.constant 0 : index
    %c0_67 = arith.constant 0 : index
    %240 = vector.load %arg13[%c0_66, %c0_67] : memref<8x32xf32, #tpu.memory_space<vmem>>, vector<8x32xf32>
    tpu.vector_store %arg13[%c0_66, %c0_67], %235 {strides = array<i32>} : memref<8x32xf32, #tpu.memory_space<vmem>>, vector<8x32xf32>,
    %c0_68 = arith.constant 0 : index
    %c0_69 = arith.constant 0 : index
    %241 = vector.load %arg14[%c0_68, %c0_69] : memref<8x32xf32, #tpu.memory_space<vmem>>, vector<8x32xf32>
    tpu.vector_store %arg14[%c0_68, %c0_69], %229 {strides = array<i32>} : memref<8x32xf32, #tpu.memory_space<vmem>>, vector<8x32xf32>,
    %c0_i32_70 = arith.constant 0 : i32
    %242 = arith.cmpi eq, %arg1, %c0_i32_70 : i32
    %243 = arith.extui %242 : i1 to i32
    %c0_i32_71 = arith.constant 0 : i32
    %244 = arith.cmpi ne, %243, %c0_i32_71 : i32
    scf.if %244 {
      %c0_72 = arith.constant 0 : index
      %c0_73 = arith.constant 0 : index
      %245 = vector.load %arg12[%c0_72, %c0_73] : memref<32x8xf32, #tpu.memory_space<vmem>>, vector<32x8xf32>
      %cst_74 = arith.constant dense<0.000000e+00> : vector<8x8xf32>
      %246 = tpu.matmul %235, %245, %cst_74 {dimension_numbers = #tpu.dot_dimension_numbers<[1], [0], [0], [1], [0, 0, 1, 1], [], []>} : vector<8x32xf32>, vector<32x8xf32>, vector<8x8xf32> -> vector<8x8xf32>
      %c0_75 = arith.constant 0 : index
      %c0_76 = arith.constant 0 : index
      %247 = vector.load %arg7[%c0_75, %c0_76] : memref<1x8xf32, #tpu.memory_space<vmem>>, vector<1x8xf32>
      %248 = vector.broadcast %247 : vector<1x8xf32> to vector<8x8xf32>
      %249 = arith.addf %246, %248 : vector<8x8xf32>
      %c0_77 = arith.constant 0 : index
      %c0_78 = arith.constant 0 : index
      %250 = vector.load %arg9[%c0_77, %c0_78] : memref<8x8xf32, #tpu.memory_space<vmem>>, vector<8x8xf32>
      tpu.vector_store %arg9[%c0_77, %c0_78], %249 {strides = array<i32>} : memref<8x8xf32, #tpu.memory_space<vmem>>, vector<8x8xf32>,
    } else {
    }
    return
  }
  func.func @transform_0(%arg0: i32, %arg1: i32) -> (i32, i32, i32) {
    %c0_i32 = arith.constant 0 : i32
    %c0_i32_0 = arith.constant 0 : i32
    return %arg1, %arg0, %c0_i32 : i32, i32, i32
  }
  func.func @transform_4(%arg0: i32, %arg1: i32) -> (i32, i32) {
    %c0_i32 = arith.constant 0 : i32
    %c0_i32_0 = arith.constant 0 : i32
    %c0_i32_1 = arith.constant 0 : i32
    return %c0_i32, %c0_i32_0 : i32, i32
  }
  func.func @transform_5(%arg0: i32, %arg1: i32) -> (i32, i32) {
    %c0_i32 = arith.constant 0 : i32
    %c0_i32_0 = arith.constant 0 : i32
    %c0_i32_1 = arith.constant 0 : i32
    return %c0_i32, %c0_i32_0 : i32, i32
  }
  func.func @transform_6(%arg0: i32, %arg1: i32) -> (i32, i32, i32) {
    %c0_i32 = arith.constant 0 : i32
    %c0_i32_0 = arith.constant 0 : i32
    return %arg1, %arg0, %c0_i32 : i32, i32, i32
  }
  func.func @transform_7(%arg0: i32, %arg1: i32) -> (i32, i32) {
    %c0_i32 = arith.constant 0 : i32
    %c0_i32_0 = arith.constant 0 : i32
    return %arg0, %c0_i32 : i32, i32
  }
}

</mosaic_0001>

<llo_original>
// kernel: tpu_custom_call.1
$region0: #{tpu_custom_call.1}
  #allocation0 [shape = 'u32[]', space=smem, size = 0x4, offset = 0x4, fixed_abs, tag = 'smem constant byte address 0x4 - core index']
  #allocation1 [shape = 'u32[144,128]{1,0:T(1,128)}', space=vmem, size = 0x12000, scoped, tag = 'internal scratch']
  #allocation2 [shape = 'f32[32,128]{1,0:T(8,128)}', space=vmem, size = 0x4000, scoped, tag = 'scratch operand']
  #allocation3 [shape = 'f32[32,32]{1,0:T(8,128)}', space=vmem, size = 0x4000, scoped, tag = 'scratch operand']
  #allocation4 [shape = 'f32[32,8]{1,0:T(8,128)}', space=vmem, size = 0x4000, scoped, tag = 'scratch operand']
  #allocation5 [shape = 'f32[8,32]{1,0:T(8,128)}', space=vmem, size = 0x1000, scoped, tag = 'scratch operand']
  #allocation6 [shape = 'f32[8,32]{1,0:T(8,128)}', space=vmem, size = 0x1000, scoped, tag = 'scratch operand']
  #allocation7 [shape = 's32[3]{0}', space=sflag, size = 0xc, scoped, tag = 'scratch operand']
  #allocation14 [shape = 's32[]', space=sflag, size = 0x4, offset = 0, fixed_abs, tag = 'sflag constant byte address 0x0 - dummy sync flag']
  #allocation15 [shape = 's32[]', space=sflag, size = 0x4, offset = 0, fixed_abs, tag = 'sflag constant byte address 0x0 - dummy sync flag']
  #allocation16 [shape = 's32[]', space=sflag, size = 0x4, offset = 0, fixed_abs, tag = 'sflag constant byte address 0x0 - dummy sync flag']
  #allocation17 [shape = 'u32[]', space=smem, size = 0x4, offset = 0x44, fixed_abs, tag = 'smem constant byte address 0x44 - assertion arg 0']
  #allocation18 [shape = 'u32[]', space=smem, size = 0x4, offset = 0x48, fixed_abs, tag = 'smem constant byte address 0x48 - assertion arg 1']
  #allocation19 [shape = 's32[]', space=sflag, size = 0x4, offset = 0, fixed_abs, tag = 'sflag constant byte address 0x0 - dummy sync flag']
  %s0 = inlined_call_operand.hbm [shape: f32[8,8,128], index: 0, kind: input, shape index: {}]
  %s1 = inlined_call_operand.vmem [shape: f32[32,128], index: 1, kind: input, shape index: {}]
  %s2 = inlined_call_operand.hbm [shape: f32[32,32], index: 2, kind: input, shape index: {}]
  %s3 = inlined_call_operand.vmem [shape: f32[32,8], index: 3, kind: input, shape index: {}]
  %s4 = inlined_call_operand.vmem [shape: f32[1,32], index: 4, kind: input, shape index: {}]
  %s5 = inlined_call_operand.vmem [shape: f32[1,8], index: 5, kind: input, shape index: {}]
  %s6 = inlined_call_operand.hbm [shape: f32[8,8,32], index: 6, kind: output, shape index: {0}]
  %s7 = inlined_call_operand.hbm [shape: f32[8,8], index: 7, kind: output, shape index: {1}]
  %8 = xla_tuple %s6, %s7
  %s9 = sld [smem:[#allocation0]]
  $region114: #{tpu_custom_call.1} parent=0
    _
  %s11 = ssub.s32 1, %s9
  %s12 = scalar_select 0, %s11, %s9
  $region1: #{tpu_custom_call.1} parent=0
    #allocation8 [shape = 'u8[32768]{0}', space=vmem, size = 0x8000, scoped, tag = 'input window, operand 0, single buffered']
    #allocation9 [shape = 's32[1]{0}', space=sflag, size = 0x4, scoped, tag = 'scoped memory for tpu_custom_call.1']
    #allocation10 [shape = 's32[1]{0}', space=sflag, size = 0x4, scoped, tag = 'scoped memory for tpu_custom_call.1']
    #allocation11 [shape = 'u8[32768]{0}', space=vmem, size = 0x8000, scoped, tag = 'output window, operand 0, single buffered']
    #allocation12 [shape = 'u8[4096]{0}', space=vmem, size = 0x1000, scoped, tag = 'output window, operand 1, single buffered']
    #allocation13 [shape = 's32[1]{0}', space=sflag, size = 0x4, scoped, tag = 'scoped memory for tpu_custom_call.1']
    %13 = vsyncpa [#allocation9], 0
    %14 = vsyncpa [#allocation10], 0
    %15 = vsyncpa [#allocation13], 0
    // Predicated region
    $region2: #{tpu_custom_call.1} parent=1 // pred_check
      _
    $region3: #{tpu_custom_call.1} parent=1 // pred_check_branch
      %17 = sbr.rel (0) target = $region5
    $region4: #{tpu_custom_call.1} parent=1 // pred_region
      %s19 = ssub.s32 1024, 1024
      %20 = vsyncadd [#allocation9], %s19
      %s21 = sshll.u32 [#allocation8], 4
      %s22 = int_to_ptr.vmem [resolvable:$true] %s21
      %27 = dma.hbm_to_vmem [thread:$0]  %s0, 1024, %s22, [#allocation9], 128, 128, 8
    $region5: #{tpu_custom_call.1} parent=1 // pred_fallthru
      _
    // Predicated region
    $region6: #{tpu_custom_call.1} parent=1 // pred_check
      _
    $region7: #{tpu_custom_call.1} parent=1 // pred_check_branch
      %29 = sbr.rel (0) target = $region9
    $region8: #{tpu_custom_call.1} parent=1 // pred_region
      _
    $region9: #{tpu_custom_call.1} parent=1 // pred_fallthru
      _
    // Predicated region
    $region10: #{tpu_custom_call.1} parent=1 // pred_check
      _
    $region11: #{tpu_custom_call.1} parent=1 // pred_check_branch
      %31 = sbr.rel (0) target = $region13
    $region12: #{tpu_custom_call.1} parent=1 // pred_region
      _
    $region13: #{tpu_custom_call.1} parent=1 // pred_fallthru
      _
    // Predicated region
    $region14: #{tpu_custom_call.1} parent=1 // pred_check
      _
    $region15: #{tpu_custom_call.1} parent=1 // pred_check_branch
      %33 = sbr.rel (0) target = $region17
    $region16: #{tpu_custom_call.1} parent=1 // pred_region
      %34 = dma.done [#allocation9], 1024
    $region17: #{tpu_custom_call.1} parent=1 // pred_fallthru
      _
    %p35 = scmp.eq.s32.totalorder 0, 0
    // Predicated region
    $region18: #{tpu_custom_call.1} parent=1 // pred_check
      %p36 = pneg %p35
    $region19: #{tpu_custom_call.1} parent=1 // pred_check_branch
      %38 = sbr.rel (%p36) target = $region21
    $region20: #{tpu_custom_call.1} parent=1 // pred_region
      %p40 = scmp.lt.u32.totalorder 32, 8
      %p41 = pneg %p40
      // Predicated region
      $region22: #{tpu_custom_call.1} parent=20 // pred_check
        _
      $region23: #{tpu_custom_call.1} parent=20 // pred_check_branch
        %43 = sbr.rel (%p40) target = $region25
      $region24: #{tpu_custom_call.1} parent=20 // pred_region
        %s58 = sand.u32 32, 7
        %p59 = scmp.eq.s32.totalorder %s58, 0
        // Predicated region
        $region37: #{tpu_custom_call.1} parent=24 // pred_check
          %p60 = pneg %p59
        $region38: #{tpu_custom_call.1} parent=24 // pred_check_branch
          %62 = sbr.rel (%p60) target = $region40
        $region39: #{tpu_custom_call.1} parent=24 // pred_region
          loop: start=0, step=1, limit=1
          $region41: #{tpu_custom_call.1} parent=39 // loop_pre_header
            _
          $region42: #{tpu_custom_call.1} parent=39 // loop_header
            %s64 = sphi 0, %s68
            %p65 = scmp.ge.s32.totalorder %s64, 1
            %s69 = sphi %s1, %s1
            %s70 = sphi [#allocation2], [#allocation2]
          $region43: #{tpu_custom_call.1} parent=39 // loop_header_branch
            %67 = sbr.rel (%p65) target = $region47
          $region44: #{tpu_custom_call.1} parent=39 // loop_body
            %v71 = vld [vmem:[%s69] sm:$0xff]
            %72 = vst [vmem:[%s70] sm:$0xff] %v71
            %v73 = vld [vmem:[%s69 + $0x8] sm:$0xff]
            %74 = vst [vmem:[%s70 + $0x8] sm:$0xff] %v73
            %v75 = vld [vmem:[%s69 + $0x10] sm:$0xff]
            %76 = vst [vmem:[%s70 + $0x10] sm:$0xff] %v75
            %v77 = vld [vmem:[%s69 + $0x18] sm:$0xff]
            %78 = vst [vmem:[%s70 + $0x18] sm:$0xff] %v77
          $region45: #{tpu_custom_call.1} parent=39 // loop_footer
            %s68 = sadd.s32 1, %s64
          $region46: #{tpu_custom_call.1} parent=39 // loop_footer_branch
            %63 = sbr.rel target = $region42
          $region47: #{tpu_custom_call.1} parent=39 // loop_exit
            _
        $region40: #{tpu_custom_call.1} parent=24 // pred_fallthru
          _
        %p79 = pneg %p59
        // Predicated region
        $region48: #{tpu_custom_call.1} parent=24 // pred_check
          _
        $region49: #{tpu_custom_call.1} parent=24 // pred_check_branch
          %81 = sbr.rel (%p59) target = $region51
        $region50: #{tpu_custom_call.1} parent=24 // pred_region
          %s82 = sand.u32 32, 7
        $region51: #{tpu_custom_call.1} parent=24 // pred_fallthru
          _
      $region25: #{tpu_custom_call.1} parent=20 // pred_fallthru
        _
      // Predicated region
      $region26: #{tpu_custom_call.1} parent=20 // pred_check
        %p44 = pneg %p40
      $region27: #{tpu_custom_call.1} parent=20 // pred_check_branch
        %46 = sbr.rel (%p44) target = $region29
      $region28: #{tpu_custom_call.1} parent=20 // pred_region
        %s47 = sshllo.u32 0, 32
        loop: start=0, step=1, limit=1
        $region30: #{tpu_custom_call.1} parent=28 // loop_pre_header
          _
        $region31: #{tpu_custom_call.1} parent=28 // loop_header
          %s49 = sphi 0, %s53
          %p50 = scmp.ge.s32.totalorder %s49, 1
          %s54 = sphi %s1, %s1
          %s55 = sphi [#allocation2], [#allocation2]
        $region32: #{tpu_custom_call.1} parent=28 // loop_header_branch
          %52 = sbr.rel (%p50) target = $region36
        $region33: #{tpu_custom_call.1} parent=28 // loop_body
          %v56 = vld [vmem:[%s54] sm:%s47]
          %57 = vst [vmem:[%s55] sm:%s47] %v56
        $region34: #{tpu_custom_call.1} parent=28 // loop_footer
          %s53 = sadd.s32 1, %s49
        $region35: #{tpu_custom_call.1} parent=28 // loop_footer_branch
          %48 = sbr.rel target = $region31
        $region36: #{tpu_custom_call.1} parent=28 // loop_exit
          _
      $region29: #{tpu_custom_call.1} parent=20 // pred_fallthru
        _
      // Predicated region
      $region52: #{tpu_custom_call.1} parent=20 // pred_check
        _
      $region53: #{tpu_custom_call.1} parent=20 // pred_check_branch
        %85 = sbr.rel (0) target = $region55
      $region54: #{tpu_custom_call.1} parent=20 // pred_region
        %86 = vsyncadd [#allocation7], 512
      $region55: #{tpu_custom_call.1} parent=20 // pred_fallthru
        _
      %s87 = scalar_lea.sflag [#allocation7], 1
      // Predicated region
      $region56: #{tpu_custom_call.1} parent=20 // pred_check
        _
      $region57: #{tpu_custom_call.1} parent=20 // pred_check_branch
        %89 = sbr.rel target = $region59
      $region58: #{tpu_custom_call.1} parent=20 // pred_region
        %90 = sst [smem:[#allocation17]] [#allocation16]
        %91 = sst [smem:[#allocation18]] [#allocation15]
      $region59: #{tpu_custom_call.1} parent=20 // pred_fallthru
        _
      %93 = shalt.err (0)
      %s95 = sshll.u32 [#allocation3], 4
      %s96 = int_to_ptr.vmem [resolvable:$true] %s95
      %98 = dma.hbm_to_vmem [thread:$0]  %s2, 512, %s96, %s87
      %s99 = scalar_lea.sflag [#allocation7], 2
      %p101 = scmp.lt.u32.totalorder 32, 8
      %p102 = pneg %p101
      // Predicated region
      $region60: #{tpu_custom_call.1} parent=20 // pred_check
        _
      $region61: #{tpu_custom_call.1} parent=20 // pred_check_branch
        %104 = sbr.rel (%p101) target = $region63
      $region62: #{tpu_custom_call.1} parent=20 // pred_region
        %s119 = sand.u32 32, 7
        %p120 = scmp.eq.s32.totalorder %s119, 0
        // Predicated region
        $region75: #{tpu_custom_call.1} parent=62 // pred_check
          %p121 = pneg %p120
        $region76: #{tpu_custom_call.1} parent=62 // pred_check_branch
          %123 = sbr.rel (%p121) target = $region78
        $region77: #{tpu_custom_call.1} parent=62 // pred_region
          loop: start=0, step=1, limit=1
          $region79: #{tpu_custom_call.1} parent=77 // loop_pre_header
            _
          $region80: #{tpu_custom_call.1} parent=77 // loop_header
            %s125 = sphi 0, %s129
            %p126 = scmp.ge.s32.totalorder %s125, 1
            %s130 = sphi %s3, %s3
            %s131 = sphi [#allocation4], [#allocation4]
          $region81: #{tpu_custom_call.1} parent=77 // loop_header_branch
            %128 = sbr.rel (%p126) target = $region85
          $region82: #{tpu_custom_call.1} parent=77 // loop_body
            %v132 = vld [vmem:[%s130] sm:$0xff]
            %133 = vst [vmem:[%s131] sm:$0xff] %v132
            %v134 = vld [vmem:[%s130 + $0x8] sm:$0xff]
            %135 = vst [vmem:[%s131 + $0x8] sm:$0xff] %v134
            %v136 = vld [vmem:[%s130 + $0x10] sm:$0xff]
            %137 = vst [vmem:[%s131 + $0x10] sm:$0xff] %v136
            %v138 = vld [vmem:[%s130 + $0x18] sm:$0xff]
            %139 = vst [vmem:[%s131 + $0x18] sm:$0xff] %v138
          $region83: #{tpu_custom_call.1} parent=77 // loop_footer
            %s129 = sadd.s32 1, %s125
          $region84: #{tpu_custom_call.1} parent=77 // loop_footer_branch
            %124 = sbr.rel target = $region80
          $region85: #{tpu_custom_call.1} parent=77 // loop_exit
            _
        $region78: #{tpu_custom_call.1} parent=62 // pred_fallthru
          _
        %p140 = pneg %p120
        // Predicated region
        $region86: #{tpu_custom_call.1} parent=62 // pred_check
          _
        $region87: #{tpu_custom_call.1} parent=62 // pred_check_branch
          %142 = sbr.rel (%p120) target = $region89
        $region88: #{tpu_custom_call.1} parent=62 // pred_region
          %s143 = sand.u32 32, 7
        $region89: #{tpu_custom_call.1} parent=62 // pred_fallthru
          _
      $region63: #{tpu_custom_call.1} parent=20 // pred_fallthru
        _
      // Predicated region
      $region64: #{tpu_custom_call.1} parent=20 // pred_check
        %p105 = pneg %p101
      $region65: #{tpu_custom_call.1} parent=20 // pred_check_branch
        %107 = sbr.rel (%p105) target = $region67
      $region66: #{tpu_custom_call.1} parent=20 // pred_region
        %s108 = sshllo.u32 0, 32
        loop: start=0, step=1, limit=1
        $region68: #{tpu_custom_call.1} parent=66 // loop_pre_header
          _
        $region69: #{tpu_custom_call.1} parent=66 // loop_header
          %s110 = sphi 0, %s114
          %p111 = scmp.ge.s32.totalorder %s110, 1
          %s115 = sphi %s3, %s3
          %s116 = sphi [#allocation4], [#allocation4]
        $region70: #{tpu_custom_call.1} parent=66 // loop_header_branch
          %113 = sbr.rel (%p111) target = $region74
        $region71: #{tpu_custom_call.1} parent=66 // loop_body
          %v117 = vld [vmem:[%s115] sm:%s108]
          %118 = vst [vmem:[%s116] sm:%s108] %v117
        $region72: #{tpu_custom_call.1} parent=66 // loop_footer
          %s114 = sadd.s32 1, %s110
        $region73: #{tpu_custom_call.1} parent=66 // loop_footer_branch
          %109 = sbr.rel target = $region69
        $region74: #{tpu_custom_call.1} parent=66 // loop_exit
          _
      $region67: #{tpu_custom_call.1} parent=20 // pred_fallthru
        _
      // Predicated region
      $region90: #{tpu_custom_call.1} parent=20 // pred_check
        _
      $region91: #{tpu_custom_call.1} parent=20 // pred_check_branch
        %146 = sbr.rel (0) target = $region93
      $region92: #{tpu_custom_call.1} parent=20 // pred_region
        %147 = vsyncadd %s99, 512
      $region93: #{tpu_custom_call.1} parent=20 // pred_fallthru
        _
      %vm148 = vcmask 261120
      %149 = vst.msk [vmem:[#allocation5] sm:$0xff] %vm148, 0.0
      %150 = vst.msk [vmem:[#allocation6] sm:$0xff] %vm148, 0.0
      %s151 = smul.u32 32, 1
      %s152 = sshll.u32 %s151, 4
      %153 = dma.done [#allocation7], %s152
      %s154 = sshll.u32 %s151, 4
      %155 = dma.done %s87, %s154
      %s156 = sshll.u32 %s151, 4
      %157 = dma.done %s99, %s156
    $region21: #{tpu_custom_call.1} parent=1 // pred_fallthru
      _
    %v158 = vld [vmem:[#allocation2] sm:$0xff]
    %v159 = vld [vmem:[#allocation2 + $0x8] sm:$0xff]
    %v160 = vld [vmem:[#allocation2 + $0x10] sm:$0xff]
    %v161 = vld [vmem:[#allocation2 + $0x18] sm:$0xff]
    %v162 = vld [vmem:[#allocation3] sm:$0xff]
    %v163 = vld [vmem:[#allocation3 + $0x8] sm:$0xff]
    %v164 = vld [vmem:[#allocation3 + $0x10] sm:$0xff]
    %v165 = vld [vmem:[#allocation3 + $0x18] sm:$0xff]
    %v166 = vld [vmem:[%s4] sm:$0x1]
    %v167 = vld [vmem:[#allocation5] sm:$0xff]
    %v168 = vld [vmem:[#allocation6] sm:$0xff]
    %v169 = vld [vmem:[#allocation8] sm:$0xff]
    %vm170 = vcmask 261120
    %v172 = vsel %vm170, %v167, 0
    %174 = vmatprep.subr.mxu0 0.0
    %175 = vmatpush1.msra.mxu0 %v158
    %176 = vmatprep.subr.mxu0 0.0
    %177 = vmatpush1.msra.mxu0 %v159
    %178 = vmatprep.subr.mxu0 0.0
    %179 = vmatpush1.msra.mxu0 %v160
    %180 = vmatprep.subr.mxu0 0.0
    %181 = vmatpush1.msra.mxu0 %v161
    %182 = vmatprep.subr.mxu0 0.0
    %183 = vmatpush1.msra.mxu0 0.0
    %184 = vmatprep.subr.mxu0 0.0
    %185 = vmatpush1.msra.mxu0 0.0
    %186 = vmatprep.subr.mxu0 0.0
    %187 = vmatpush1.msra.mxu0 0.0
    %188 = vmatprep.subr.mxu0 0.0
    %189 = vmatpush1.msra.mxu0 0.0
    %190 = vmatprep.subr.mxu0 0.0
    %191 = vmatpush1.msra.mxu0 0.0
    %192 = vmatprep.subr.mxu0 0.0
    %193 = vmatpush1.msra.mxu0 0.0
    %194 = vmatprep.subr.mxu0 0.0
    %195 = vmatpush1.msra.mxu0 0.0
    %196 = vmatprep.subr.mxu0 0.0
    %197 = vmatpush1.msra.mxu0 0.0
    %198 = vmatprep.subr.mxu0 0.0
    %199 = vmatpush1.msra.mxu0 0.0
    %200 = vmatprep.subr.mxu0 0.0
    %201 = vmatpush1.msra.mxu0 0.0
    %202 = vmatprep.subr.mxu0 0.0
    %203 = vmatpush1.msra.mxu0 0.0
    %204 = vmatprep.subr.mxu0 0.0
    %205 = vmatpush1.msra.mxu0 0.0
    %206 = vmatprep.subr.mxu0 0.0
    %207 = vmatpush1.msra.mxu0 0.0
    %208 = vmatprep.subr.mxu0 0.0
    %209 = vmatpush1.msra.mxu0 0.0
    %210 = vmatprep.subr.mxu0 0.0
    %211 = vmatpush1.msra.mxu0 0.0
    %212 = vmatprep.subr.mxu0 0.0
    %213 = vmatpush1.msra.mxu0 0.0
    %214 = vmatprep.subr.mxu0 0.0
    %215 = vmatpush1.msra.mxu0 0.0
    %216 = vmatprep.subr.mxu0 0.0
    %217 = vmatpush1.msra.mxu0 0.0
    %218 = vmatprep.subr.mxu0 0.0
    %219 = vmatpush1.msra.mxu0 0.0
    %220 = vmatprep.subr.mxu0 0.0
    %221 = vmatpush1.msra.mxu0 0.0
    %222 = vmatprep.subr.mxu0 0.0
    %223 = vmatpush1.msra.mxu0 0.0
    %224 = vmatprep.subr.mxu0 0.0
    %225 = vmatpush1.msra.mxu0 0.0
    %226 = vmatprep.subr.mxu0 0.0
    %227 = vmatpush1.msra.mxu0 0.0
    %228 = vmatprep.subr.mxu0 0.0
    %229 = vmatpush1.msra.mxu0 0.0
    %230 = vmatprep.subr.mxu0 0.0
    %231 = vmatpush1.msra.mxu0 0.0
    %232 = vmatprep.subr.mxu0 0.0
    %233 = vmatpush1.msra.mxu0 0.0
    %234 = vmatprep.subr.mxu0 0.0
    %235 = vmatpush1.msra.mxu0 0.0
    %236 = vmatprep.subr.mxu0 0.0
    %237 = vmatpush1.msra.mxu0 0.0
    %238 = vmatprep.mubr.f32.mxu0 0.0
    %239 = vmatmul.mubr.f32.gmra.mrb[0].mxu0 %v172
    %v240 = vpop.f32.mrb[0].mxu0
    %v241 = vadd.f32 0.0, %v240
    %v242 = vpop.f32.mrb[0].mxu0
    %243 = vdwg.mxu0
    %v244 = vadd.f32 %v169, %v241
    %v245 = vxor.u32 %v244, 2147483648
    %v246 = vmul.f32 %v245, 1.442695
    %v247 = vpow.pop %v246
    %v248 = vadd.f32 %v247, 1.0
    %v249 = vrcp.pop %v248
    %v250 = vmul.f32 1.0, %v249
    %v251 = vtanh.pop %v244
    %253 = vrot.lane.b32.xlu0 %v168, 32
    %v254 = vpop.permute.xlu0 %253
    %v256 = vmul.f32 %v250, %v254
    %258 = vrot.lane.b32.xlu0 %v251, 32
    %v259 = vpop.permute.xlu0 %258
    %v261 = vmul.f32 %v250, %v259
    %263 = vrot.lane.b32.xlu0 %v261, 32
    %v264 = vpop.permute.xlu0 %263
    %v266 = vadd.f32 %v256, %v264
    %v267 = vtanh.pop %v266
    %269 = vrot.lane.b32.xlu0 %v267, 32
    %v270 = vpop.permute.xlu0 %269
    %v272 = vmul.f32 %v250, %v270
    %v274 = vlaneseq
    %v275 = vshrl.u32 %v274, 7
    %v276 = vsub.s32 0, %v275
    %v277 = vrot.slane %v166, %v276
    %280 = vrot.lane.b32.xlu0 %v272, 64
    %v281 = vpop.permute.xlu0 %280
    %v282 = vsel %vm170, %v281, 0
    %284 = vmatprep.subr.mxu0 0.0
    %285 = vmatpush1.msra.mxu0 %v162
    %286 = vmatprep.subr.mxu0 0.0
    %287 = vmatpush1.msra.mxu0 %v163
    %288 = vmatprep.subr.mxu0 0.0
    %289 = vmatpush1.msra.mxu0 %v164
    %290 = vmatprep.subr.mxu0 0.0
    %291 = vmatpush1.msra.mxu0 %v165
    %292 = vmatprep.subr.mxu0 0.0
    %293 = vmatpush1.msra.mxu0 0.0
    %294 = vmatprep.subr.mxu0 0.0
    %295 = vmatpush1.msra.mxu0 0.0
    %296 = vmatprep.subr.mxu0 0.0
    %297 = vmatpush1.msra.mxu0 0.0
    %298 = vmatprep.subr.mxu0 0.0
    %299 = vmatpush1.msra.mxu0 0.0
    %300 = vmatprep.subr.mxu0 0.0
    %301 = vmatpush1.msra.mxu0 0.0
    %302 = vmatprep.subr.mxu0 0.0
    %303 = vmatpush1.msra.mxu0 0.0
    %304 = vmatprep.subr.mxu0 0.0
    %305 = vmatpush1.msra.mxu0 0.0
    %306 = vmatprep.subr.mxu0 0.0
    %307 = vmatpush1.msra.mxu0 0.0
    %308 = vmatprep.subr.mxu0 0.0
    %309 = vmatpush1.msra.mxu0 0.0
    %310 = vmatprep.subr.mxu0 0.0
    %311 = vmatpush1.msra.mxu0 0.0
    %312 = vmatprep.subr.mxu0 0.0
    %313 = vmatpush1.msra.mxu0 0.0
    %314 = vmatprep.subr.mxu0 0.0
    %315 = vmatpush1.msra.mxu0 0.0
    %316 = vmatprep.subr.mxu0 0.0
    %317 = vmatpush1.msra.mxu0 0.0
    %318 = vmatprep.subr.mxu0 0.0
    %319 = vmatpush1.msra.mxu0 0.0
    %320 = vmatprep.subr.mxu0 0.0
    %321 = vmatpush1.msra.mxu0 0.0
    %322 = vmatprep.subr.mxu0 0.0
    %323 = vmatpush1.msra.mxu0 0.0
    %324 = vmatprep.subr.mxu0 0.0
    %325 = vmatpush1.msra.mxu0 0.0
    %326 = vmatprep.subr.mxu0 0.0
    %327 = vmatpush1.msra.mxu0 0.0
    %328 = vmatprep.subr.mxu0 0.0
    %329 = vmatpush1.msra.mxu0 0.0
    %330 = vmatprep.subr.mxu0 0.0
    %331 = vmatpush1.msra.mxu0 0.0
    %332 = vmatprep.subr.mxu0 0.0
    %333 = vmatpush1.msra.mxu0 0.0
    %334 = vmatprep.subr.mxu0 0.0
    %335 = vmatpush1.msra.mxu0 0.0
    %336 = vmatprep.subr.mxu0 0.0
    %337 = vmatpush1.msra.mxu0 0.0
    %338 = vmatprep.subr.mxu0 0.0
    %339 = vmatpush1.msra.mxu0 0.0
    %340 = vmatprep.subr.mxu0 0.0
    %341 = vmatpush1.msra.mxu0 0.0
    %342 = vmatprep.subr.mxu0 0.0
    %343 = vmatpush1.msra.mxu0 0.0
    %344 = vmatprep.subr.mxu0 0.0
    %345 = vmatpush1.msra.mxu0 0.0
    %346 = vmatprep.subr.mxu0 0.0
    %347 = vmatpush1.msra.mxu0 0.0
    %348 = vmatprep.mubr.f32.mxu0 0.0
    %349 = vmatmul.mubr.f32.gmra.mrb[0].mxu0 %v282
    %v350 = vpop.f32.mrb[0].mxu0
    %v351 = vadd.f32 %v277, %v350
    %v352 = vpop.f32.mrb[0].mxu0
    %353 = vdwg.mxu0
    %v354 = vtanh.pop %v351
    %355 = vst.msk [vmem:[#allocation11] sm:$0xff] %vm170, %v354
    %s356 = scalar_lea.vmem [#allocation8], 8
    %v357 = vld [vmem:[%s356] sm:$0xff]
    %v359 = vsel %vm170, %v354, 0
    %361 = vmatprep.subr.mxu0 0.0
    %362 = vmatpush1.msra.mxu0 %v158
    %363 = vmatprep.subr.mxu0 0.0
    %364 = vmatpush1.msra.mxu0 %v159
    %365 = vmatprep.subr.mxu0 0.0
    %366 = vmatpush1.msra.mxu0 %v160
    %367 = vmatprep.subr.mxu0 0.0
    %368 = vmatpush1.msra.mxu0 %v161
    %369 = vmatprep.subr.mxu0 0.0
    %370 = vmatpush1.msra.mxu0 0.0
    %371 = vmatprep.subr.mxu0 0.0
    %372 = vmatpush1.msra.mxu0 0.0
    %373 = vmatprep.subr.mxu0 0.0
    %374 = vmatpush1.msra.mxu0 0.0
    %375 = vmatprep.subr.mxu0 0.0
    %376 = vmatpush1.msra.mxu0 0.0
    %377 = vmatprep.subr.mxu0 0.0
    %378 = vmatpush1.msra.mxu0 0.0
    %379 = vmatprep.subr.mxu0 0.0
    %380 = vmatpush1.msra.mxu0 0.0
    %381 = vmatprep.subr.mxu0 0.0
    %382 = vmatpush1.msra.mxu0 0.0
    %383 = vmatprep.subr.mxu0 0.0
    %384 = vmatpush1.msra.mxu0 0.0
    %385 = vmatprep.subr.mxu0 0.0
    %386 = vmatpush1.msra.mxu0 0.0
    %387 = vmatprep.subr.mxu0 0.0
    %388 = vmatpush1.msra.mxu0 0.0
    %389 = vmatprep.subr.mxu0 0.0
    %390 = vmatpush1.msra.mxu0 0.0
    %391 = vmatprep.subr.mxu0 0.0
    %392 = vmatpush1.msra.mxu0 0.0
    %393 = vmatprep.subr.mxu0 0.0
    %394 = vmatpush1.msra.mxu0 0.0
    %395 = vmatprep.subr.mxu0 0.0
    %396 = vmatpush1.msra.mxu0 0.0
    %397 = vmatprep.subr.mxu0 0.0
    %398 = vmatpush1.msra.mxu0 0.0
    %399 = vmatprep.subr.mxu0 0.0
    %400 = vmatpush1.msra.mxu0 0.0
    %401 = vmatprep.subr.mxu0 0.0
    %402 = vmatpush1.msra.mxu0 0.0
    %403 = vmatprep.subr.mxu0 0.0
    %404 = vmatpush1.msra.mxu0 0.0
    %405 = vmatprep.subr.mxu0 0.0
    %406 = vmatpush1.msra.mxu0 0.0
    %407 = vmatprep.subr.mxu0 0.0
    %408 = vmatpush1.msra.mxu0 0.0
    %409 = vmatprep.subr.mxu0 0.0
    %410 = vmatpush1.msra.mxu0 0.0
    %411 = vmatprep.subr.mxu0 0.0
    %412 = vmatpush1.msra.mxu0 0.0
    %413 = vmatprep.subr.mxu0 0.0
    %414 = vmatpush1.msra.mxu0 0.0
    %415 = vmatprep.subr.mxu0 0.0
    %416 = vmatpush1.msra.mxu0 0.0
    %417 = vmatprep.subr.mxu0 0.0
    %418 = vmatpush1.msra.mxu0 0.0
    %419 = vmatprep.subr.mxu0 0.0
    %420 = vmatpush1.msra.mxu0 0.0
    %421 = vmatprep.subr.mxu0 0.0
    %422 = vmatpush1.msra.mxu0 0.0
    %423 = vmatprep.subr.mxu0 0.0
    %424 = vmatpush1.msra.mxu0 0.0
    %425 = vmatprep.mubr.f32.mxu0 0.0
    %426 = vmatmul.mubr.f32.gmra.mrb[0].mxu0 %v359
    %v427 = vpop.f32.mrb[0].mxu0
    %v428 = vadd.f32 0.0, %v427
    %v429 = vpop.f32.mrb[0].mxu0
    %430 = vdwg.mxu0
    %v431 = vadd.f32 %v357, %v428
    %v432 = vxor.u32 %v431, 2147483648
    %v433 = vmul.f32 %v432, 1.442695
    %v434 = vpow.pop %v433
    %v435 = vadd.f32 %v434, 1.0
    %v436 = vrcp.pop %v435
    %v437 = vmul.f32 1.0, %v436
    %v438 = vtanh.pop %v431
    %v439 = vmul.f32 %v437, %v266
    %441 = vrot.lane.b32.xlu0 %v438, 32
    %v442 = vpop.permute.xlu0 %441
    %v444 = vmul.f32 %v437, %v442
    %446 = vrot.lane.b32.xlu0 %v444, 32
    %v447 = vpop.permute.xlu0 %446
    %v449 = vadd.f32 %v439, %v447
    %v450 = vtanh.pop %v449
    %452 = vrot.lane.b32.xlu0 %v450, 32
    %v453 = vpop.permute.xlu0 %452
    %v455 = vmul.f32 %v437, %v453
    %457 = vrot.lane.b32.xlu0 %v455, 64
    %v458 = vpop.permute.xlu0 %457
    %v459 = vsel %vm170, %v458, 0
    %461 = vmatprep.subr.mxu0 0.0
    %462 = vmatpush1.msra.mxu0 %v162
    %463 = vmatprep.subr.mxu0 0.0
    %464 = vmatpush1.msra.mxu0 %v163
    %465 = vmatprep.subr.mxu0 0.0
    %466 = vmatpush1.msra.mxu0 %v164
    %467 = vmatprep.subr.mxu0 0.0
    %468 = vmatpush1.msra.mxu0 %v165
    %469 = vmatprep.subr.mxu0 0.0
    %470 = vmatpush1.msra.mxu0 0.0
    %471 = vmatprep.subr.mxu0 0.0
    %472 = vmatpush1.msra.mxu0 0.0
    %473 = vmatprep.subr.mxu0 0.0
    %474 = vmatpush1.msra.mxu0 0.0
    %475 = vmatprep.subr.mxu0 0.0
    %476 = vmatpush1.msra.mxu0 0.0
    %477 = vmatprep.subr.mxu0 0.0
    %478 = vmatpush1.msra.mxu0 0.0
    %479 = vmatprep.subr.mxu0 0.0
    %480 = vmatpush1.msra.mxu0 0.0
    %481 = vmatprep.subr.mxu0 0.0
    %482 = vmatpush1.msra.mxu0 0.0
    %483 = vmatprep.subr.mxu0 0.0
    %484 = vmatpush1.msra.mxu0 0.0
    %485 = vmatprep.subr.mxu0 0.0
    %486 = vmatpush1.msra.mxu0 0.0
    %487 = vmatprep.subr.mxu0 0.0
    %488 = vmatpush1.msra.mxu0 0.0
    %489 = vmatprep.subr.mxu0 0.0
    %490 = vmatpush1.msra.mxu0 0.0
    %491 = vmatprep.subr.mxu0 0.0
    %492 = vmatpush1.msra.mxu0 0.0
    %493 = vmatprep.subr.mxu0 0.0
    %494 = vmatpush1.msra.mxu0 0.0
    %495 = vmatprep.subr.mxu0 0.0
    %496 = vmatpush1.msra.mxu0 0.0
    %497 = vmatprep.subr.mxu0 0.0
    %498 = vmatpush1.msra.mxu0 0.0
    %499 = vmatprep.subr.mxu0 0.0
    %500 = vmatpush1.msra.mxu0 0.0
    %501 = vmatprep.subr.mxu0 0.0
    %502 = vmatpush1.msra.mxu0 0.0
    %503 = vmatprep.subr.mxu0 0.0
    %504 = vmatpush1.msra.mxu0 0.0
    %505 = vmatprep.subr.mxu0 0.0
    %506 = vmatpush1.msra.mxu0 0.0
    %507 = vmatprep.subr.mxu0 0.0
    %508 = vmatpush1.msra.mxu0 0.0
    %509 = vmatprep.subr.mxu0 0.0
    %510 = vmatpush1.msra.mxu0 0.0
    %511 = vmatprep.subr.mxu0 0.0
    %512 = vmatpush1.msra.mxu0 0.0
    %513 = vmatprep.subr.mxu0 0.0
    %514 = vmatpush1.msra.mxu0 0.0
    %515 = vmatprep.subr.mxu0 0.0
    %516 = vmatpush1.msra.mxu0 0.0
    %517 = vmatprep.subr.mxu0 0.0
    %518 = vmatpush1.msra.mxu0 0.0
    %519 = vmatprep.subr.mxu0 0.0
    %520 = vmatpush1.msra.mxu0 0.0
    %521 = vmatprep.subr.mxu0 0.0
    %522 = vmatpush1.msra.mxu0 0.0
    %523 = vmatprep.subr.mxu0 0.0
    %524 = vmatpush1.msra.mxu0 0.0
    %525 = vmatprep.mubr.f32.mxu0 0.0
    %526 = vmatmul.mubr.f32.gmra.mrb[0].mxu0 %v459
    %v527 = vpop.f32.mrb[0].mxu0
    %v528 = vadd.f32 %v277, %v527
    %v529 = vpop.f32.mrb[0].mxu0
    %530 = vdwg.mxu0
    %v531 = vtanh.pop %v528
    %s532 = scalar_lea.vmem [#allocation11], 8
    %533 = vst.msk [vmem:[%s532] sm:$0xff] %vm170, %v531
    %s534 = scalar_lea.vmem [#allocation8], 16
    %v535 = vld [vmem:[%s534] sm:$0xff]
    %v537 = vsel %vm170, %v531, 0
    %539 = vmatprep.subr.mxu0 0.0
    %540 = vmatpush1.msra.mxu0 %v158
    %541 = vmatprep.subr.mxu0 0.0
    %542 = vmatpush1.msra.mxu0 %v159
    %543 = vmatprep.subr.mxu0 0.0
    %544 = vmatpush1.msra.mxu0 %v160
    %545 = vmatprep.subr.mxu0 0.0
    %546 = vmatpush1.msra.mxu0 %v161
    %547 = vmatprep.subr.mxu0 0.0
    %548 = vmatpush1.msra.mxu0 0.0
    %549 = vmatprep.subr.mxu0 0.0
    %550 = vmatpush1.msra.mxu0 0.0
    %551 = vmatprep.subr.mxu0 0.0
    %552 = vmatpush1.msra.mxu0 0.0
    %553 = vmatprep.subr.mxu0 0.0
    %554 = vmatpush1.msra.mxu0 0.0
    %555 = vmatprep.subr.mxu0 0.0
    %556 = vmatpush1.msra.mxu0 0.0
    %557 = vmatprep.subr.mxu0 0.0
    %558 = vmatpush1.msra.mxu0 0.0
    %559 = vmatprep.subr.mxu0 0.0
    %560 = vmatpush1.msra.mxu0 0.0
    %561 = vmatprep.subr.mxu0 0.0
    %562 = vmatpush1.msra.mxu0 0.0
    %563 = vmatprep.subr.mxu0 0.0
    %564 = vmatpush1.msra.mxu0 0.0
    %565 = vmatprep.subr.mxu0 0.0
    %566 = vmatpush1.msra.mxu0 0.0
    %567 = vmatprep.subr.mxu0 0.0
    %568 = vmatpush1.msra.mxu0 0.0
    %569 = vmatprep.subr.mxu0 0.0
    %570 = vmatpush1.msra.mxu0 0.0
    %571 = vmatprep.subr.mxu0 0.0
    %572 = vmatpush1.msra.mxu0 0.0
    %573 = vmatprep.subr.mxu0 0.0
    %574 = vmatpush1.msra.mxu0 0.0
    %575 = vmatprep.subr.mxu0 0.0
    %576 = vmatpush1.msra.mxu0 0.0
    %577 = vmatprep.subr.mxu0 0.0
    %578 = vmatpush1.msra.mxu0 0.0
    %579 = vmatprep.subr.mxu0 0.0
    %580 = vmatpush1.msra.mxu0 0.0
    %581 = vmatprep.subr.mxu0 0.0
    %582 = vmatpush1.msra.mxu0 0.0
    %583 = vmatprep.subr.mxu0 0.0
    %584 = vmatpush1.msra.mxu0 0.0
    %585 = vmatprep.subr.mxu0 0.0
    %586 = vmatpush1.msra.mxu0 0.0
    %587 = vmatprep.subr.mxu0 0.0
    %588 = vmatpush1.msra.mxu0 0.0
    %589 = vmatprep.subr.mxu0 0.0
    %590 = vmatpush1.msra.mxu0 0.0
    %591 = vmatprep.subr.mxu0 0.0
    %592 = vmatpush1.msra.mxu0 0.0
    %593 = vmatprep.subr.mxu0 0.0
    %594 = vmatpush1.msra.mxu0 0.0
    %595 = vmatprep.subr.mxu0 0.0
    %596 = vmatpush1.msra.mxu0 0.0
    %597 = vmatprep.subr.mxu0 0.0
    %598 = vmatpush1.msra.mxu0 0.0
    %599 = vmatprep.subr.mxu0 0.0
    %600 = vmatpush1.msra.mxu0 0.0
    %601 = vmatprep.subr.mxu0 0.0
    %602 = vmatpush1.msra.mxu0 0.0
    %603 = vmatprep.mubr.f32.mxu0 0.0
    %604 = vmatmul.mubr.f32.gmra.mrb[0].mxu0 %v537
    %v605 = vpop.f32.mrb[0].mxu0
    %v606 = vadd.f32 0.0, %v605
    %v607 = vpop.f32.mrb[0].mxu0
    %608 = vdwg.mxu0
    %v609 = vadd.f32 %v535, %v606
    %v610 = vxor.u32 %v609, 2147483648
    %v611 = vmul.f32 %v610, 1.442695
    %v612 = vpow.pop %v611
    %v613 = vadd.f32 %v612, 1.0
    %v614 = vrcp.pop %v613
    %v615 = vmul.f32 1.0, %v614
    %v616 = vtanh.pop %v609
    %v617 = vmul.f32 %v615, %v449
    %619 = vrot.lane.b32.xlu0 %v616, 32
    %v620 = vpop.permute.xlu0 %619
    %v622 = vmul.f32 %v615, %v620
    %624 = vrot.lane.b32.xlu0 %v622, 32
    %v625 = vpop.permute.xlu0 %624
    %v627 = vadd.f32 %v617, %v625
    %v628 = vtanh.pop %v627
    %630 = vrot.lane.b32.xlu0 %v628, 32
    %v631 = vpop.permute.xlu0 %630
    %v633 = vmul.f32 %v615, %v631
    %635 = vrot.lane.b32.xlu0 %v633, 64
    %v636 = vpop.permute.xlu0 %635
    %v637 = vsel %vm170, %v636, 0
    %639 = vmatprep.subr.mxu0 0.0
    %640 = vmatpush1.msra.mxu0 %v162
    %641 = vmatprep.subr.mxu0 0.0
    %642 = vmatpush1.msra.mxu0 %v163
    %643 = vmatprep.subr.mxu0 0.0
    %644 = vmatpush1.msra.mxu0 %v164
    %645 = vmatprep.subr.mxu0 0.0
    %646 = vmatpush1.msra.mxu0 %v165
    %647 = vmatprep.subr.mxu0 0.0
    %648 = vmatpush1.msra.mxu0 0.0
    %649 = vmatprep.subr.mxu0 0.0
    %650 = vmatpush1.msra.mxu0 0.0
    %651 = vmatprep.subr.mxu0 0.0
    %652 = vmatpush1.msra.mxu0 0.0
    %653 = vmatprep.subr.mxu0 0.0
    %654 = vmatpush1.msra.mxu0 0.0
    %655 = vmatprep.subr.mxu0 0.0
    %656 = vmatpush1.msra.mxu0 0.0
    %657 = vmatprep.subr.mxu0 0.0
    %658 = vmatpush1.msra.mxu0 0.0
    %659 = vmatprep.subr.mxu0 0.0
    %660 = vmatpush1.msra.mxu0 0.0
    %661 = vmatprep.subr.mxu0 0.0
    %662 = vmatpush1.msra.mxu0 0.0
    %663 = vmatprep.subr.mxu0 0.0
    %664 = vmatpush1.msra.mxu0 0.0
    %665 = vmatprep.subr.mxu0 0.0
    %666 = vmatpush1.msra.mxu0 0.0
    %667 = vmatprep.subr.mxu0 0.0
    %668 = vmatpush1.msra.mxu0 0.0
    %669 = vmatprep.subr.mxu0 0.0
    %670 = vmatpush1.msra.mxu0 0.0
    %671 = vmatprep.subr.mxu0 0.0
    %672 = vmatpush1.msra.mxu0 0.0
    %673 = vmatprep.subr.mxu0 0.0
    %674 = vmatpush1.msra.mxu0 0.0
    %675 = vmatprep.subr.mxu0 0.0
    %676 = vmatpush1.msra.mxu0 0.0
    %677 = vmatprep.subr.mxu0 0.0
    %678 = vmatpush1.msra.mxu0 0.0
    %679 = vmatprep.subr.mxu0 0.0
    %680 = vmatpush1.msra.mxu0 0.0
    %681 = vmatprep.subr.mxu0 0.0
    %682 = vmatpush1.msra.mxu0 0.0
    %683 = vmatprep.subr.mxu0 0.0
    %684 = vmatpush1.msra.mxu0 0.0
    %685 = vmatprep.subr.mxu0 0.0
    %686 = vmatpush1.msra.mxu0 0.0
    %687 = vmatprep.subr.mxu0 0.0
    %688 = vmatpush1.msra.mxu0 0.0
    %689 = vmatprep.subr.mxu0 0.0
    %690 = vmatpush1.msra.mxu0 0.0
    %691 = vmatprep.subr.mxu0 0.0
    %692 = vmatpush1.msra.mxu0 0.0
    %693 = vmatprep.subr.mxu0 0.0
    %694 = vmatpush1.msra.mxu0 0.0
    %695 = vmatprep.subr.mxu0 0.0
    %696 = vmatpush1.msra.mxu0 0.0
    %697 = vmatprep.subr.mxu0 0.0
    %698 = vmatpush1.msra.mxu0 0.0
    %699 = vmatprep.subr.mxu0 0.0
    %700 = vmatpush1.msra.mxu0 0.0
    %701 = vmatprep.subr.mxu0 0.0
    %702 = vmatpush1.msra.mxu0 0.0
    %703 = vmatprep.mubr.f32.mxu0 0.0
    %704 = vmatmul.mubr.f32.gmra.mrb[0].mxu0 %v637
    %v705 = vpop.f32.mrb[0].mxu0
    %v706 = vadd.f32 %v277, %v705
    %v707 = vpop.f32.mrb[0].mxu0
    %708 = vdwg.mxu0
    %v709 = vtanh.pop %v706
    %s710 = scalar_lea.vmem [#allocation11], 16
    %711 = vst.msk [vmem:[%s710] sm:$0xff] %vm170, %v709
    %s712 = scalar_lea.vmem [#allocation8], 24
    %v713 = vld [vmem:[%s712] sm:$0xff]
    %v715 = vsel %vm170, %v709, 0
    %717 = vmatprep.subr.mxu0 0.0
    %718 = vmatpush1.msra.mxu0 %v158
    %719 = vmatprep.subr.mxu0 0.0
    %720 = vmatpush1.msra.mxu0 %v159
    %721 = vmatprep.subr.mxu0 0.0
    %722 = vmatpush1.msra.mxu0 %v160
    %723 = vmatprep.subr.mxu0 0.0
    %724 = vmatpush1.msra.mxu0 %v161
    %725 = vmatprep.subr.mxu0 0.0
    %726 = vmatpush1.msra.mxu0 0.0
    %727 = vmatprep.subr.mxu0 0.0
    %728 = vmatpush1.msra.mxu0 0.0
    %729 = vmatprep.subr.mxu0 0.0
    %730 = vmatpush1.msra.mxu0 0.0
    %731 = vmatprep.subr.mxu0 0.0
    %732 = vmatpush1.msra.mxu0 0.0
    %733 = vmatprep.subr.mxu0 0.0
    %734 = vmatpush1.msra.mxu0 0.0
    %735 = vmatprep.subr.mxu0 0.0
    %736 = vmatpush1.msra.mxu0 0.0
    %737 = vmatprep.subr.mxu0 0.0
    %738 = vmatpush1.msra.mxu0 0.0
    %739 = vmatprep.subr.mxu0 0.0
    %740 = vmatpush1.msra.mxu0 0.0
    %741 = vmatprep.subr.mxu0 0.0
    %742 = vmatpush1.msra.mxu0 0.0
    %743 = vmatprep.subr.mxu0 0.0
    %744 = vmatpush1.msra.mxu0 0.0
    %745 = vmatprep.subr.mxu0 0.0
    %746 = vmatpush1.msra.mxu0 0.0
    %747 = vmatprep.subr.mxu0 0.0
    %748 = vmatpush1.msra.mxu0 0.0
    %749 = vmatprep.subr.mxu0 0.0
    %750 = vmatpush1.msra.mxu0 0.0
    %751 = vmatprep.subr.mxu0 0.0
    %752 = vmatpush1.msra.mxu0 0.0
    %753 = vmatprep.subr.mxu0 0.0
    %754 = vmatpush1.msra.mxu0 0.0
    %755 = vmatprep.subr.mxu0 0.0
    %756 = vmatpush1.msra.mxu0 0.0
    %757 = vmatprep.subr.mxu0 0.0
    %758 = vmatpush1.msra.mxu0 0.0
    %759 = vmatprep.subr.mxu0 0.0
    %760 = vmatpush1.msra.mxu0 0.0
    %761 = vmatprep.subr.mxu0 0.0
    %762 = vmatpush1.msra.mxu0 0.0
    %763 = vmatprep.subr.mxu0 0.0
    %764 = vmatpush1.msra.mxu0 0.0
    %765 = vmatprep.subr.mxu0 0.0
    %766 = vmatpush1.msra.mxu0 0.0
    %767 = vmatprep.subr.mxu0 0.0
    %768 = vmatpush1.msra.mxu0 0.0
    %769 = vmatprep.subr.mxu0 0.0
    %770 = vmatpush1.msra.mxu0 0.0
    %771 = vmatprep.subr.mxu0 0.0
    %772 = vmatpush1.msra.mxu0 0.0
    %773 = vmatprep.subr.mxu0 0.0
    %774 = vmatpush1.msra.mxu0 0.0
    %775 = vmatprep.subr.mxu0 0.0
    %776 = vmatpush1.msra.mxu0 0.0
    %777 = vmatprep.subr.mxu0 0.0
    %778 = vmatpush1.msra.mxu0 0.0
    %779 = vmatprep.subr.mxu0 0.0
    %780 = vmatpush1.msra.mxu0 0.0
    %781 = vmatprep.mubr.f32.mxu0 0.0
    %782 = vmatmul.mubr.f32.gmra.mrb[0].mxu0 %v715
    %v783 = vpop.f32.mrb[0].mxu0
    %v784 = vadd.f32 0.0, %v783
    %v785 = vpop.f32.mrb[0].mxu0
    %786 = vdwg.mxu0
    %v787 = vadd.f32 %v713, %v784
    %v788 = vxor.u32 %v787, 2147483648
    %v789 = vmul.f32 %v788, 1.442695
    %v790 = vpow.pop %v789
    %v791 = vadd.f32 %v790, 1.0
    %v792 = vrcp.pop %v791
    %v793 = vmul.f32 1.0, %v792
    %v794 = vtanh.pop %v787
    %v795 = vmul.f32 %v793, %v627
    %797 = vrot.lane.b32.xlu0 %v794, 32
    %v798 = vpop.permute.xlu0 %797
    %v800 = vmul.f32 %v793, %v798
    %802 = vrot.lane.b32.xlu0 %v800, 32
    %v803 = vpop.permute.xlu0 %802
    %v805 = vadd.f32 %v795, %v803
    %v806 = vtanh.pop %v805
    %808 = vrot.lane.b32.xlu0 %v806, 32
    %v809 = vpop.permute.xlu0 %808
    %v811 = vmul.f32 %v793, %v809
    %813 = vrot.lane.b32.xlu0 %v811, 64
    %v814 = vpop.permute.xlu0 %813
    %v815 = vsel %vm170, %v814, 0
    %817 = vmatprep.subr.mxu0 0.0
    %818 = vmatpush1.msra.mxu0 %v162
    %819 = vmatprep.subr.mxu0 0.0
    %820 = vmatpush1.msra.mxu0 %v163
    %821 = vmatprep.subr.mxu0 0.0
    %822 = vmatpush1.msra.mxu0 %v164
    %823 = vmatprep.subr.mxu0 0.0
    %824 = vmatpush1.msra.mxu0 %v165
    %825 = vmatprep.subr.mxu0 0.0
    %826 = vmatpush1.msra.mxu0 0.0
    %827 = vmatprep.subr.mxu0 0.0
    %828 = vmatpush1.msra.mxu0 0.0
    %829 = vmatprep.subr.mxu0 0.0
    %830 = vmatpush1.msra.mxu0 0.0
    %831 = vmatprep.subr.mxu0 0.0
    %832 = vmatpush1.msra.mxu0 0.0
    %833 = vmatprep.subr.mxu0 0.0
    %834 = vmatpush1.msra.mxu0 0.0
    %835 = vmatprep.subr.mxu0 0.0
    %836 = vmatpush1.msra.mxu0 0.0
    %837 = vmatprep.subr.mxu0 0.0
    %838 = vmatpush1.msra.mxu0 0.0
    %839 = vmatprep.subr.mxu0 0.0
    %840 = vmatpush1.msra.mxu0 0.0
    %841 = vmatprep.subr.mxu0 0.0
    %842 = vmatpush1.msra.mxu0 0.0
    %843 = vmatprep.subr.mxu0 0.0
    %844 = vmatpush1.msra.mxu0 0.0
    %845 = vmatprep.subr.mxu0 0.0
    %846 = vmatpush1.msra.mxu0 0.0
    %847 = vmatprep.subr.mxu0 0.0
    %848 = vmatpush1.msra.mxu0 0.0
    %849 = vmatprep.subr.mxu0 0.0
    %850 = vmatpush1.msra.mxu0 0.0
    %851 = vmatprep.subr.mxu0 0.0
    %852 = vmatpush1.msra.mxu0 0.0
    %853 = vmatprep.subr.mxu0 0.0
    %854 = vmatpush1.msra.mxu0 0.0
    %855 = vmatprep.subr.mxu0 0.0
    %856 = vmatpush1.msra.mxu0 0.0
    %857 = vmatprep.subr.mxu0 0.0
    %858 = vmatpush1.msra.mxu0 0.0
    %859 = vmatprep.subr.mxu0 0.0
    %860 = vmatpush1.msra.mxu0 0.0
    %861 = vmatprep.subr.mxu0 0.0
    %862 = vmatpush1.msra.mxu0 0.0
    %863 = vmatprep.subr.mxu0 0.0
    %864 = vmatpush1.msra.mxu0 0.0
    %865 = vmatprep.subr.mxu0 0.0
    %866 = vmatpush1.msra.mxu0 0.0
    %867 = vmatprep.subr.mxu0 0.0
    %868 = vmatpush1.msra.mxu0 0.0
    %869 = vmatprep.subr.mxu0 0.0
    %870 = vmatpush1.msra.mxu0 0.0
    %871 = vmatprep.subr.mxu0 0.0
    %872 = vmatpush1.msra.mxu0 0.0
    %873 = vmatprep.subr.mxu0 0.0
    %874 = vmatpush1.msra.mxu0 0.0
    %875 = vmatprep.subr.mxu0 0.0
    %876 = vmatpush1.msra.mxu0 0.0
    %877 = vmatprep.subr.mxu0 0.0
    %878 = vmatpush1.msra.mxu0 0.0
    %879 = vmatprep.subr.mxu0 0.0
    %880 = vmatpush1.msra.mxu0 0.0
    %881 = vmatprep.mubr.f32.mxu0 0.0
    %882 = vmatmul.mubr.f32.gmra.mrb[0].mxu0 %v815
    %v883 = vpop.f32.mrb[0].mxu0
    %v884 = vadd.f32 %v277, %v883
    %v885 = vpop.f32.mrb[0].mxu0
    %886 = vdwg.mxu0
    %v887 = vtanh.pop %v884
    %s888 = scalar_lea.vmem [#allocation11], 24
    %889 = vst.msk [vmem:[%s888] sm:$0xff] %vm170, %v887
    %s890 = scalar_lea.vmem [#allocation8], 32
    %v891 = vld [vmem:[%s890] sm:$0xff]
    %v893 = vsel %vm170, %v887, 0
    %895 = vmatprep.subr.mxu0 0.0
    %896 = vmatpush1.msra.mxu0 %v158
    %897 = vmatprep.subr.mxu0 0.0
    %898 = vmatpush1.msra.mxu0 %v159
    %899 = vmatprep.subr.mxu0 0.0
    %900 = vmatpush1.msra.mxu0 %v160
    %901 = vmatprep.subr.mxu0 0.0
    %902 = vmatpush1.msra.mxu0 %v161
    %903 = vmatprep.subr.mxu0 0.0
    %904 = vmatpush1.msra.mxu0 0.0
    %905 = vmatprep.subr.mxu0 0.0
    %906 = vmatpush1.msra.mxu0 0.0
    %907 = vmatprep.subr.mxu0 0.0
    %908 = vmatpush1.msra.mxu0 0.0
    %909 = vmatprep.subr.mxu0 0.0
    %910 = vmatpush1.msra.mxu0 0.0
    %911 = vmatprep.subr.mxu0 0.0
    %912 = vmatpush1.msra.mxu0 0.0
    %913 = vmatprep.subr.mxu0 0.0
    %914 = vmatpush1.msra.mxu0 0.0
    %915 = vmatprep.subr.mxu0 0.0
    %916 = vmatpush1.msra.mxu0 0.0
    %917 = vmatprep.subr.mxu0 0.0
    %918 = vmatpush1.msra.mxu0 0.0
    %919 = vmatprep.subr.mxu0 0.0
    %920 = vmatpush1.msra.mxu0 0.0
    %921 = vmatprep.subr.mxu0 0.0
    %922 = vmatpush1.msra.mxu0 0.0
    %923 = vmatprep.subr.mxu0 0.0
    %924 = vmatpush1.msra.mxu0 0.0
    %925 = vmatprep.subr.mxu0 0.0
    %926 = vmatpush1.msra.mxu0 0.0
    %927 = vmatprep.subr.mxu0 0.0
    %928 = vmatpush1.msra.mxu0 0.0
    %929 = vmatprep.subr.mxu0 0.0
    %930 = vmatpush1.msra.mxu0 0.0
    %931 = vmatprep.subr.mxu0 0.0
    %932 = vmatpush1.msra.mxu0 0.0
    %933 = vmatprep.subr.mxu0 0.0
    %934 = vmatpush1.msra.mxu0 0.0
    %935 = vmatprep.subr.mxu0 0.0
    %936 = vmatpush1.msra.mxu0 0.0
    %937 = vmatprep.subr.mxu0 0.0
    %938 = vmatpush1.msra.mxu0 0.0
    %939 = vmatprep.subr.mxu0 0.0
    %940 = vmatpush1.msra.mxu0 0.0
    %941 = vmatprep.subr.mxu0 0.0
    %942 = vmatpush1.msra.mxu0 0.0
    %943 = vmatprep.subr.mxu0 0.0
    %944 = vmatpush1.msra.mxu0 0.0
    %945 = vmatprep.subr.mxu0 0.0
    %946 = vmatpush1.msra.mxu0 0.0
    %947 = vmatprep.subr.mxu0 0.0
    %948 = vmatpush1.msra.mxu0 0.0
    %949 = vmatprep.subr.mxu0 0.0
    %950 = vmatpush1.msra.mxu0 0.0
    %951 = vmatprep.subr.mxu0 0.0
    %952 = vmatpush1.msra.mxu0 0.0
    %953 = vmatprep.subr.mxu0 0.0
    %954 = vmatpush1.msra.mxu0 0.0
    %955 = vmatprep.subr.mxu0 0.0
    %956 = vmatpush1.msra.mxu0 0.0
    %957 = vmatprep.subr.mxu0 0.0
    %958 = vmatpush1.msra.mxu0 0.0
    %959 = vmatprep.mubr.f32.mxu0 0.0
    %960 = vmatmul.mubr.f32.gmra.mrb[0].mxu0 %v893
    %v961 = vpop.f32.mrb[0].mxu0
    %v962 = vadd.f32 0.0, %v961
    %v963 = vpop.f32.mrb[0].mxu0
    %964 = vdwg.mxu0
    %v965 = vadd.f32 %v891, %v962
    %v966 = vxor.u32 %v965, 2147483648
    %v967 = vmul.f32 %v966, 1.442695
    %v968 = vpow.pop %v967
    %v969 = vadd.f32 %v968, 1.0
    %v970 = vrcp.pop %v969
    %v971 = vmul.f32 1.0, %v970
    %v972 = vtanh.pop %v965
    %v973 = vmul.f32 %v971, %v805
    %975 = vrot.lane.b32.xlu0 %v972, 32
    %v976 = vpop.permute.xlu0 %975
    %v978 = vmul.f32 %v971, %v976
    %980 = vrot.lane.b32.xlu0 %v978, 32
    %v981 = vpop.permute.xlu0 %980
    %v983 = vadd.f32 %v973, %v981
    %v984 = vtanh.pop %v983
    %986 = vrot.lane.b32.xlu0 %v984, 32
    %v987 = vpop.permute.xlu0 %986
    %v989 = vmul.f32 %v971, %v987
    %991 = vrot.lane.b32.xlu0 %v989, 64
    %v992 = vpop.permute.xlu0 %991
    %v993 = vsel %vm170, %v992, 0
    %995 = vmatprep.subr.mxu0 0.0
    %996 = vmatpush1.msra.mxu0 %v162
    %997 = vmatprep.subr.mxu0 0.0
    %998 = vmatpush1.msra.mxu0 %v163
    %999 = vmatprep.subr.mxu0 0.0
    %1000 = vmatpush1.msra.mxu0 %v164
    %1001 = vmatprep.subr.mxu0 0.0
    %1002 = vmatpush1.msra.mxu0 %v165
    %1003 = vmatprep.subr.mxu0 0.0
    %1004 = vmatpush1.msra.mxu0 0.0
    %1005 = vmatprep.subr.mxu0 0.0
    %1006 = vmatpush1.msra.mxu0 0.0
    %1007 = vmatprep.subr.mxu0 0.0
    %1008 = vmatpush1.msra.mxu0 0.0
    %1009 = vmatprep.subr.mxu0 0.0
    %1010 = vmatpush1.msra.mxu0 0.0
    %1011 = vmatprep.subr.mxu0 0.0
    %1012 = vmatpush1.msra.mxu0 0.0
    %1013 = vmatprep.subr.mxu0 0.0
    %1014 = vmatpush1.msra.mxu0 0.0
    %1015 = vmatprep.subr.mxu0 0.0
    %1016 = vmatpush1.msra.mxu0 0.0
    %1017 = vmatprep.subr.mxu0 0.0
    %1018 = vmatpush1.msra.mxu0 0.0
    %1019 = vmatprep.subr.mxu0 0.0
    %1020 = vmatpush1.msra.mxu0 0.0
    %1021 = vmatprep.subr.mxu0 0.0
    %1022 = vmatpush1.msra.mxu0 0.0
    %1023 = vmatprep.subr.mxu0 0.0
    %1024 = vmatpush1.msra.mxu0 0.0
    %1025 = vmatprep.subr.mxu0 0.0
    %1026 = vmatpush1.msra.mxu0 0.0
    %1027 = vmatprep.subr.mxu0 0.0
    %1028 = vmatpush1.msra.mxu0 0.0
    %1029 = vmatprep.subr.mxu0 0.0
    %1030 = vmatpush1.msra.mxu0 0.0
    %1031 = vmatprep.subr.mxu0 0.0
    %1032 = vmatpush1.msra.mxu0 0.0
    %1033 = vmatprep.subr.mxu0 0.0
    %1034 = vmatpush1.msra.mxu0 0.0
    %1035 = vmatprep.subr.mxu0 0.0
    %1036 = vmatpush1.msra.mxu0 0.0
    %1037 = vmatprep.subr.mxu0 0.0
    %1038 = vmatpush1.msra.mxu0 0.0
    %1039 = vmatprep.subr.mxu0 0.0
    %1040 = vmatpush1.msra.mxu0 0.0
    %1041 = vmatprep.subr.mxu0 0.0
    %1042 = vmatpush1.msra.mxu0 0.0
    %1043 = vmatprep.subr.mxu0 0.0
    %1044 = vmatpush1.msra.mxu0 0.0
    %1045 = vmatprep.subr.mxu0 0.0
    %1046 = vmatpush1.msra.mxu0 0.0
    %1047 = vmatprep.subr.mxu0 0.0
    %1048 = vmatpush1.msra.mxu0 0.0
    %1049 = vmatprep.subr.mxu0 0.0
    %1050 = vmatpush1.msra.mxu0 0.0
    %1051 = vmatprep.subr.mxu0 0.0
    %1052 = vmatpush1.msra.mxu0 0.0
    %1053 = vmatprep.subr.mxu0 0.0
    %1054 = vmatpush1.msra.mxu0 0.0
    %1055 = vmatprep.subr.mxu0 0.0
    %1056 = vmatpush1.msra.mxu0 0.0
    %1057 = vmatprep.subr.mxu0 0.0
    %1058 = vmatpush1.msra.mxu0 0.0
    %1059 = vmatprep.mubr.f32.mxu0 0.0
    %1060 = vmatmul.mubr.f32.gmra.mrb[0].mxu0 %v993
    %v1061 = vpop.f32.mrb[0].mxu0
    %v1062 = vadd.f32 %v277, %v1061
    %v1063 = vpop.f32.mrb[0].mxu0
    %1064 = vdwg.mxu0
    %v1065 = vtanh.pop %v1062
    %s1066 = scalar_lea.vmem [#allocation11], 32
    %1067 = vst.msk [vmem:[%s1066] sm:$0xff] %vm170, %v1065
    %s1068 = scalar_lea.vmem [#allocation8], 40
    %v1069 = vld [vmem:[%s1068] sm:$0xff]
    %v1071 = vsel %vm170, %v1065, 0
    %1073 = vmatprep.subr.mxu0 0.0
    %1074 = vmatpush1.msra.mxu0 %v158
    %1075 = vmatprep.subr.mxu0 0.0
    %1076 = vmatpush1.msra.mxu0 %v159
    %1077 = vmatprep.subr.mxu0 0.0
    %1078 = vmatpush1.msra.mxu0 %v160
    %1079 = vmatprep.subr.mxu0 0.0
    %1080 = vmatpush1.msra.mxu0 %v161
    %1081 = vmatprep.subr.mxu0 0.0
    %1082 = vmatpush1.msra.mxu0 0.0
    %1083 = vmatprep.subr.mxu0 0.0
    %1084 = vmatpush1.msra.mxu0 0.0
    %1085 = vmatprep.subr.mxu0 0.0
    %1086 = vmatpush1.msra.mxu0 0.0
    %1087 = vmatprep.subr.mxu0 0.0
    %1088 = vmatpush1.msra.mxu0 0.0
    %1089 = vmatprep.subr.mxu0 0.0
    %1090 = vmatpush1.msra.mxu0 0.0
    %1091 = vmatprep.subr.mxu0 0.0
    %1092 = vmatpush1.msra.mxu0 0.0
    %1093 = vmatprep.subr.mxu0 0.0
    %1094 = vmatpush1.msra.mxu0 0.0
    %1095 = vmatprep.subr.mxu0 0.0
    %1096 = vmatpush1.msra.mxu0 0.0
    %1097 = vmatprep.subr.mxu0 0.0
    %1098 = vmatpush1.msra.mxu0 0.0
    %1099 = vmatprep.subr.mxu0 0.0
    %1100 = vmatpush1.msra.mxu0 0.0
    %1101 = vmatprep.subr.mxu0 0.0
    %1102 = vmatpush1.msra.mxu0 0.0
    %1103 = vmatprep.subr.mxu0 0.0
    %1104 = vmatpush1.msra.mxu0 0.0
    %1105 = vmatprep.subr.mxu0 0.0
    %1106 = vmatpush1.msra.mxu0 0.0
    %1107 = vmatprep.subr.mxu0 0.0
    %1108 = vmatpush1.msra.mxu0 0.0
    %1109 = vmatprep.subr.mxu0 0.0
    %1110 = vmatpush1.msra.mxu0 0.0
    %1111 = vmatprep.subr.mxu0 0.0
    %1112 = vmatpush1.msra.mxu0 0.0
    %1113 = vmatprep.subr.mxu0 0.0
    %1114 = vmatpush1.msra.mxu0 0.0
    %1115 = vmatprep.subr.mxu0 0.0
    %1116 = vmatpush1.msra.mxu0 0.0
    %1117 = vmatprep.subr.mxu0 0.0
    %1118 = vmatpush1.msra.mxu0 0.0
    %1119 = vmatprep.subr.mxu0 0.0
    %1120 = vmatpush1.msra.mxu0 0.0
    %1121 = vmatprep.subr.mxu0 0.0
    %1122 = vmatpush1.msra.mxu0 0.0
    %1123 = vmatprep.subr.mxu0 0.0
    %1124 = vmatpush1.msra.mxu0 0.0
    %1125 = vmatprep.subr.mxu0 0.0
    %1126 = vmatpush1.msra.mxu0 0.0
    %1127 = vmatprep.subr.mxu0 0.0
    %1128 = vmatpush1.msra.mxu0 0.0
    %1129 = vmatprep.subr.mxu0 0.0
    %1130 = vmatpush1.msra.mxu0 0.0
    %1131 = vmatprep.subr.mxu0 0.0
    %1132 = vmatpush1.msra.mxu0 0.0
    %1133 = vmatprep.subr.mxu0 0.0
    %1134 = vmatpush1.msra.mxu0 0.0
    %1135 = vmatprep.subr.mxu0 0.0
    %1136 = vmatpush1.msra.mxu0 0.0
    %1137 = vmatprep.mubr.f32.mxu0 0.0
    %1138 = vmatmul.mubr.f32.gmra.mrb[0].mxu0 %v1071
    %v1139 = vpop.f32.mrb[0].mxu0
    %v1140 = vadd.f32 0.0, %v1139
    %v1141 = vpop.f32.mrb[0].mxu0
    %1142 = vdwg.mxu0
    %v1143 = vadd.f32 %v1069, %v1140
    %v1144 = vxor.u32 %v1143, 2147483648
    %v1145 = vmul.f32 %v1144, 1.442695
    %v1146 = vpow.pop %v1145
    %v1147 = vadd.f32 %v1146, 1.0
    %v1148 = vrcp.pop %v1147
    %v1149 = vmul.f32 1.0, %v1148
    %v1150 = vtanh.pop %v1143
    %v1151 = vmul.f32 %v1149, %v983
    %1153 = vrot.lane.b32.xlu0 %v1150, 32
    %v1154 = vpop.permute.xlu0 %1153
    %v1156 = vmul.f32 %v1149, %v1154
    %1158 = vrot.lane.b32.xlu0 %v1156, 32
    %v1159 = vpop.permute.xlu0 %1158
    %v1161 = vadd.f32 %v1151, %v1159
    %v1162 = vtanh.pop %v1161
    %1164 = vrot.lane.b32.xlu0 %v1162, 32
    %v1165 = vpop.permute.xlu0 %1164
    %v1167 = vmul.f32 %v1149, %v1165
    %1169 = vrot.lane.b32.xlu0 %v1167, 64
    %v1170 = vpop.permute.xlu0 %1169
    %v1171 = vsel %vm170, %v1170, 0
    %1173 = vmatprep.subr.mxu0 0.0
    %1174 = vmatpush1.msra.mxu0 %v162
    %1175 = vmatprep.subr.mxu0 0.0
    %1176 = vmatpush1.msra.mxu0 %v163
    %1177 = vmatprep.subr.mxu0 0.0
    %1178 = vmatpush1.msra.mxu0 %v164
    %1179 = vmatprep.subr.mxu0 0.0
    %1180 = vmatpush1.msra.mxu0 %v165
    %1181 = vmatprep.subr.mxu0 0.0
    %1182 = vmatpush1.msra.mxu0 0.0
    %1183 = vmatprep.subr.mxu0 0.0
    %1184 = vmatpush1.msra.mxu0 0.0
    %1185 = vmatprep.subr.mxu0 0.0
    %1186 = vmatpush1.msra.mxu0 0.0
    %1187 = vmatprep.subr.mxu0 0.0
    %1188 = vmatpush1.msra.mxu0 0.0
    %1189 = vmatprep.subr.mxu0 0.0
    %1190 = vmatpush1.msra.mxu0 0.0
    %1191 = vmatprep.subr.mxu0 0.0
    %1192 = vmatpush1.msra.mxu0 0.0
    %1193 = vmatprep.subr.mxu0 0.0
    %1194 = vmatpush1.msra.mxu0 0.0
    %1195 = vmatprep.subr.mxu0 0.0
    %1196 = vmatpush1.msra.mxu0 0.0
    %1197 = vmatprep.subr.mxu0 0.0
    %1198 = vmatpush1.msra.mxu0 0.0
    %1199 = vmatprep.subr.mxu0 0.0
    %1200 = vmatpush1.msra.mxu0 0.0
    %1201 = vmatprep.subr.mxu0 0.0
    %1202 = vmatpush1.msra.mxu0 0.0
    %1203 = vmatprep.subr.mxu0 0.0
    %1204 = vmatpush1.msra.mxu0 0.0
    %1205 = vmatprep.subr.mxu0 0.0
    %1206 = vmatpush1.msra.mxu0 0.0
    %1207 = vmatprep.subr.mxu0 0.0
    %1208 = vmatpush1.msra.mxu0 0.0
    %1209 = vmatprep.subr.mxu0 0.0
    %1210 = vmatpush1.msra.mxu0 0.0
    %1211 = vmatprep.subr.mxu0 0.0
    %1212 = vmatpush1.msra.mxu0 0.0
    %1213 = vmatprep.subr.mxu0 0.0
    %1214 = vmatpush1.msra.mxu0 0.0
    %1215 = vmatprep.subr.mxu0 0.0
    %1216 = vmatpush1.msra.mxu0 0.0
    %1217 = vmatprep.subr.mxu0 0.0
    %1218 = vmatpush1.msra.mxu0 0.0
    %1219 = vmatprep.subr.mxu0 0.0
    %1220 = vmatpush1.msra.mxu0 0.0
    %1221 = vmatprep.subr.mxu0 0.0
    %1222 = vmatpush1.msra.mxu0 0.0
    %1223 = vmatprep.subr.mxu0 0.0
    %1224 = vmatpush1.msra.mxu0 0.0
    %1225 = vmatprep.subr.mxu0 0.0
    %1226 = vmatpush1.msra.mxu0 0.0
    %1227 = vmatprep.subr.mxu0 0.0
    %1228 = vmatpush1.msra.mxu0 0.0
    %1229 = vmatprep.subr.mxu0 0.0
    %1230 = vmatpush1.msra.mxu0 0.0
    %1231 = vmatprep.subr.mxu0 0.0
    %1232 = vmatpush1.msra.mxu0 0.0
    %1233 = vmatprep.subr.mxu0 0.0
    %1234 = vmatpush1.msra.mxu0 0.0
    %1235 = vmatprep.subr.mxu0 0.0
    %1236 = vmatpush1.msra.mxu0 0.0
    %1237 = vmatprep.mubr.f32.mxu0 0.0
    %1238 = vmatmul.mubr.f32.gmra.mrb[0].mxu0 %v1171
    %v1239 = vpop.f32.mrb[0].mxu0
    %v1240 = vadd.f32 %v277, %v1239
    %v1241 = vpop.f32.mrb[0].mxu0
    %1242 = vdwg.mxu0
    %v1243 = vtanh.pop %v1240
    %s1244 = scalar_lea.vmem [#allocation11], 40
    %1245 = vst.msk [vmem:[%s1244] sm:$0xff] %vm170, %v1243
    %s1246 = scalar_lea.vmem [#allocation8], 48
    %v1247 = vld [vmem:[%s1246] sm:$0xff]
    %v1249 = vsel %vm170, %v1243, 0
    %1251 = vmatprep.subr.mxu0 0.0
    %1252 = vmatpush1.msra.mxu0 %v158
    %1253 = vmatprep.subr.mxu0 0.0
    %1254 = vmatpush1.msra.mxu0 %v159
    %1255 = vmatprep.subr.mxu0 0.0
    %1256 = vmatpush1.msra.mxu0 %v160
    %1257 = vmatprep.subr.mxu0 0.0
    %1258 = vmatpush1.msra.mxu0 %v161
    %1259 = vmatprep.subr.mxu0 0.0
    %1260 = vmatpush1.msra.mxu0 0.0
    %1261 = vmatprep.subr.mxu0 0.0
    %1262 = vmatpush1.msra.mxu0 0.0
    %1263 = vmatprep.subr.mxu0 0.0
    %1264 = vmatpush1.msra.mxu0 0.0
    %1265 = vmatprep.subr.mxu0 0.0
    %1266 = vmatpush1.msra.mxu0 0.0
    %1267 = vmatprep.subr.mxu0 0.0
    %1268 = vmatpush1.msra.mxu0 0.0
    %1269 = vmatprep.subr.mxu0 0.0
    %1270 = vmatpush1.msra.mxu0 0.0
    %1271 = vmatprep.subr.mxu0 0.0
    %1272 = vmatpush1.msra.mxu0 0.0
    %1273 = vmatprep.subr.mxu0 0.0
    %1274 = vmatpush1.msra.mxu0 0.0
    %1275 = vmatprep.subr.mxu0 0.0
    %1276 = vmatpush1.msra.mxu0 0.0
    %1277 = vmatprep.subr.mxu0 0.0
    %1278 = vmatpush1.msra.mxu0 0.0
    %1279 = vmatprep.subr.mxu0 0.0
    %1280 = vmatpush1.msra.mxu0 0.0
    %1281 = vmatprep.subr.mxu0 0.0
    %1282 = vmatpush1.msra.mxu0 0.0
    %1283 = vmatprep.subr.mxu0 0.0
    %1284 = vmatpush1.msra.mxu0 0.0
    %1285 = vmatprep.subr.mxu0 0.0
    %1286 = vmatpush1.msra.mxu0 0.0
    %1287 = vmatprep.subr.mxu0 0.0
    %1288 = vmatpush1.msra.mxu0 0.0
    %1289 = vmatprep.subr.mxu0 0.0
    %1290 = vmatpush1.msra.mxu0 0.0
    %1291 = vmatprep.subr.mxu0 0.0
    %1292 = vmatpush1.msra.mxu0 0.0
    %1293 = vmatprep.subr.mxu0 0.0
    %1294 = vmatpush1.msra.mxu0 0.0
    %1295 = vmatprep.subr.mxu0 0.0
    %1296 = vmatpush1.msra.mxu0 0.0
    %1297 = vmatprep.subr.mxu0 0.0
    %1298 = vmatpush1.msra.mxu0 0.0
    %1299 = vmatprep.subr.mxu0 0.0
    %1300 = vmatpush1.msra.mxu0 0.0
    %1301 = vmatprep.subr.mxu0 0.0
    %1302 = vmatpush1.msra.mxu0 0.0
    %1303 = vmatprep.subr.mxu0 0.0
    %1304 = vmatpush1.msra.mxu0 0.0
    %1305 = vmatprep.subr.mxu0 0.0
    %1306 = vmatpush1.msra.mxu0 0.0
    %1307 = vmatprep.subr.mxu0 0.0
    %1308 = vmatpush1.msra.mxu0 0.0
    %1309 = vmatprep.subr.mxu0 0.0
    %1310 = vmatpush1.msra.mxu0 0.0
    %1311 = vmatprep.subr.mxu0 0.0
    %1312 = vmatpush1.msra.mxu0 0.0
    %1313 = vmatprep.subr.mxu0 0.0
    %1314 = vmatpush1.msra.mxu0 0.0
    %1315 = vmatprep.mubr.f32.mxu0 0.0
    %1316 = vmatmul.mubr.f32.gmra.mrb[0].mxu0 %v1249
    %v1317 = vpop.f32.mrb[0].mxu0
    %v1318 = vadd.f32 0.0, %v1317
    %v1319 = vpop.f32.mrb[0].mxu0
    %1320 = vdwg.mxu0
    %v1321 = vadd.f32 %v1247, %v1318
    %v1322 = vxor.u32 %v1321, 2147483648
    %v1323 = vmul.f32 %v1322, 1.442695
    %v1324 = vpow.pop %v1323
    %v1325 = vadd.f32 %v1324, 1.0
    %v1326 = vrcp.pop %v1325
    %v1327 = vmul.f32 1.0, %v1326
    %v1328 = vtanh.pop %v1321
    %v1329 = vmul.f32 %v1327, %v1161
    %1331 = vrot.lane.b32.xlu0 %v1328, 32
    %v1332 = vpop.permute.xlu0 %1331
    %v1334 = vmul.f32 %v1327, %v1332
    %1336 = vrot.lane.b32.xlu0 %v1334, 32
    %v1337 = vpop.permute.xlu0 %1336
    %v1339 = vadd.f32 %v1329, %v1337
    %v1340 = vtanh.pop %v1339
    %1342 = vrot.lane.b32.xlu0 %v1340, 32
    %v1343 = vpop.permute.xlu0 %1342
    %v1345 = vmul.f32 %v1327, %v1343
    %1347 = vrot.lane.b32.xlu0 %v1345, 64
    %v1348 = vpop.permute.xlu0 %1347
    %v1349 = vsel %vm170, %v1348, 0
    %1351 = vmatprep.subr.mxu0 0.0
    %1352 = vmatpush1.msra.mxu0 %v162
    %1353 = vmatprep.subr.mxu0 0.0
    %1354 = vmatpush1.msra.mxu0 %v163
    %1355 = vmatprep.subr.mxu0 0.0
    %1356 = vmatpush1.msra.mxu0 %v164
    %1357 = vmatprep.subr.mxu0 0.0
    %1358 = vmatpush1.msra.mxu0 %v165
    %1359 = vmatprep.subr.mxu0 0.0
    %1360 = vmatpush1.msra.mxu0 0.0
    %1361 = vmatprep.subr.mxu0 0.0
    %1362 = vmatpush1.msra.mxu0 0.0
    %1363 = vmatprep.subr.mxu0 0.0
    %1364 = vmatpush1.msra.mxu0 0.0
    %1365 = vmatprep.subr.mxu0 0.0
    %1366 = vmatpush1.msra.mxu0 0.0
    %1367 = vmatprep.subr.mxu0 0.0
    %1368 = vmatpush1.msra.mxu0 0.0
    %1369 = vmatprep.subr.mxu0 0.0
    %1370 = vmatpush1.msra.mxu0 0.0
    %1371 = vmatprep.subr.mxu0 0.0
    %1372 = vmatpush1.msra.mxu0 0.0
    %1373 = vmatprep.subr.mxu0 0.0
    %1374 = vmatpush1.msra.mxu0 0.0
    %1375 = vmatprep.subr.mxu0 0.0
    %1376 = vmatpush1.msra.mxu0 0.0
    %1377 = vmatprep.subr.mxu0 0.0
    %1378 = vmatpush1.msra.mxu0 0.0
    %1379 = vmatprep.subr.mxu0 0.0
    %1380 = vmatpush1.msra.mxu0 0.0
    %1381 = vmatprep.subr.mxu0 0.0
    %1382 = vmatpush1.msra.mxu0 0.0
    %1383 = vmatprep.subr.mxu0 0.0
    %1384 = vmatpush1.msra.mxu0 0.0
    %1385 = vmatprep.subr.mxu0 0.0
    %1386 = vmatpush1.msra.mxu0 0.0
    %1387 = vmatprep.subr.mxu0 0.0
    %1388 = vmatpush1.msra.mxu0 0.0
    %1389 = vmatprep.subr.mxu0 0.0
    %1390 = vmatpush1.msra.mxu0 0.0
    %1391 = vmatprep.subr.mxu0 0.0
    %1392 = vmatpush1.msra.mxu0 0.0
    %1393 = vmatprep.subr.mxu0 0.0
    %1394 = vmatpush1.msra.mxu0 0.0
    %1395 = vmatprep.subr.mxu0 0.0
    %1396 = vmatpush1.msra.mxu0 0.0
    %1397 = vmatprep.subr.mxu0 0.0
    %1398 = vmatpush1.msra.mxu0 0.0
    %1399 = vmatprep.subr.mxu0 0.0
    %1400 = vmatpush1.msra.mxu0 0.0
    %1401 = vmatprep.subr.mxu0 0.0
    %1402 = vmatpush1.msra.mxu0 0.0
    %1403 = vmatprep.subr.mxu0 0.0
    %1404 = vmatpush1.msra.mxu0 0.0
    %1405 = vmatprep.subr.mxu0 0.0
    %1406 = vmatpush1.msra.mxu0 0.0
    %1407 = vmatprep.subr.mxu0 0.0
    %1408 = vmatpush1.msra.mxu0 0.0
    %1409 = vmatprep.subr.mxu0 0.0
    %1410 = vmatpush1.msra.mxu0 0.0
    %1411 = vmatprep.subr.mxu0 0.0
    %1412 = vmatpush1.msra.mxu0 0.0
    %1413 = vmatprep.subr.mxu0 0.0
    %1414 = vmatpush1.msra.mxu0 0.0
    %1415 = vmatprep.mubr.f32.mxu0 0.0
    %1416 = vmatmul.mubr.f32.gmra.mrb[0].mxu0 %v1349
    %v1417 = vpop.f32.mrb[0].mxu0
    %v1418 = vadd.f32 %v277, %v1417
    %v1419 = vpop.f32.mrb[0].mxu0
    %1420 = vdwg.mxu0
    %v1421 = vtanh.pop %v1418
    %s1422 = scalar_lea.vmem [#allocation11], 48
    %1423 = vst.msk [vmem:[%s1422] sm:$0xff] %vm170, %v1421
    %s1424 = scalar_lea.vmem [#allocation8], 56
    %v1425 = vld [vmem:[%s1424] sm:$0xff]
    %v1427 = vsel %vm170, %v1421, 0
    %1429 = vmatprep.subr.mxu0 0.0
    %1430 = vmatpush1.msra.mxu0 %v158
    %1431 = vmatprep.subr.mxu0 0.0
    %1432 = vmatpush1.msra.mxu0 %v159
    %1433 = vmatprep.subr.mxu0 0.0
    %1434 = vmatpush1.msra.mxu0 %v160
    %1435 = vmatprep.subr.mxu0 0.0
    %1436 = vmatpush1.msra.mxu0 %v161
    %1437 = vmatprep.subr.mxu0 0.0
    %1438 = vmatpush1.msra.mxu0 0.0
    %1439 = vmatprep.subr.mxu0 0.0
    %1440 = vmatpush1.msra.mxu0 0.0
    %1441 = vmatprep.subr.mxu0 0.0
    %1442 = vmatpush1.msra.mxu0 0.0
    %1443 = vmatprep.subr.mxu0 0.0
    %1444 = vmatpush1.msra.mxu0 0.0
    %1445 = vmatprep.subr.mxu0 0.0
    %1446 = vmatpush1.msra.mxu0 0.0
    %1447 = vmatprep.subr.mxu0 0.0
    %1448 = vmatpush1.msra.mxu0 0.0
    %1449 = vmatprep.subr.mxu0 0.0
    %1450 = vmatpush1.msra.mxu0 0.0
    %1451 = vmatprep.subr.mxu0 0.0
    %1452 = vmatpush1.msra.mxu0 0.0
    %1453 = vmatprep.subr.mxu0 0.0
    %1454 = vmatpush1.msra.mxu0 0.0
    %1455 = vmatprep.subr.mxu0 0.0
    %1456 = vmatpush1.msra.mxu0 0.0
    %1457 = vmatprep.subr.mxu0 0.0
    %1458 = vmatpush1.msra.mxu0 0.0
    %1459 = vmatprep.subr.mxu0 0.0
    %1460 = vmatpush1.msra.mxu0 0.0
    %1461 = vmatprep.subr.mxu0 0.0
    %1462 = vmatpush1.msra.mxu0 0.0
    %1463 = vmatprep.subr.mxu0 0.0
    %1464 = vmatpush1.msra.mxu0 0.0
    %1465 = vmatprep.subr.mxu0 0.0
    %1466 = vmatpush1.msra.mxu0 0.0
    %1467 = vmatprep.subr.mxu0 0.0
    %1468 = vmatpush1.msra.mxu0 0.0
    %1469 = vmatprep.subr.mxu0 0.0
    %1470 = vmatpush1.msra.mxu0 0.0
    %1471 = vmatprep.subr.mxu0 0.0
    %1472 = vmatpush1.msra.mxu0 0.0
    %1473 = vmatprep.subr.mxu0 0.0
    %1474 = vmatpush1.msra.mxu0 0.0
    %1475 = vmatprep.subr.mxu0 0.0
    %1476 = vmatpush1.msra.mxu0 0.0
    %1477 = vmatprep.subr.mxu0 0.0
    %1478 = vmatpush1.msra.mxu0 0.0
    %1479 = vmatprep.subr.mxu0 0.0
    %1480 = vmatpush1.msra.mxu0 0.0
    %1481 = vmatprep.subr.mxu0 0.0
    %1482 = vmatpush1.msra.mxu0 0.0
    %1483 = vmatprep.subr.mxu0 0.0
    %1484 = vmatpush1.msra.mxu0 0.0
    %1485 = vmatprep.subr.mxu0 0.0
    %1486 = vmatpush1.msra.mxu0 0.0
    %1487 = vmatprep.subr.mxu0 0.0
    %1488 = vmatpush1.msra.mxu0 0.0
    %1489 = vmatprep.subr.mxu0 0.0
    %1490 = vmatpush1.msra.mxu0 0.0
    %1491 = vmatprep.subr.mxu0 0.0
    %1492 = vmatpush1.msra.mxu0 0.0
    %1493 = vmatprep.mubr.f32.mxu0 0.0
    %1494 = vmatmul.mubr.f32.gmra.mrb[0].mxu0 %v1427
    %v1495 = vpop.f32.mrb[0].mxu0
    %v1496 = vadd.f32 0.0, %v1495
    %v1497 = vpop.f32.mrb[0].mxu0
    %1498 = vdwg.mxu0
    %v1499 = vadd.f32 %v1425, %v1496
    %v1500 = vxor.u32 %v1499, 2147483648
    %v1501 = vmul.f32 %v1500, 1.442695
    %v1502 = vpow.pop %v1501
    %v1503 = vadd.f32 %v1502, 1.0
    %v1504 = vrcp.pop %v1503
    %v1505 = vmul.f32 1.0, %v1504
    %v1506 = vtanh.pop %v1499
    %v1507 = vmul.f32 %v1505, %v1339
    %1509 = vrot.lane.b32.xlu0 %v1506, 32
    %v1510 = vpop.permute.xlu0 %1509
    %v1512 = vmul.f32 %v1505, %v1510
    %1514 = vrot.lane.b32.xlu0 %v1512, 32
    %v1515 = vpop.permute.xlu0 %1514
    %v1517 = vadd.f32 %v1507, %v1515
    %v1518 = vtanh.pop %v1517
    %1520 = vrot.lane.b32.xlu0 %v1518, 32
    %v1521 = vpop.permute.xlu0 %1520
    %v1523 = vmul.f32 %v1505, %v1521
    %1525 = vrot.lane.b32.xlu0 %v1523, 64
    %v1526 = vpop.permute.xlu0 %1525
    %v1527 = vsel %vm170, %v1526, 0
    %1529 = vmatprep.subr.mxu0 0.0
    %1530 = vmatpush1.msra.mxu0 %v162
    %1531 = vmatprep.subr.mxu0 0.0
    %1532 = vmatpush1.msra.mxu0 %v163
    %1533 = vmatprep.subr.mxu0 0.0
    %1534 = vmatpush1.msra.mxu0 %v164
    %1535 = vmatprep.subr.mxu0 0.0
    %1536 = vmatpush1.msra.mxu0 %v165
    %1537 = vmatprep.subr.mxu0 0.0
    %1538 = vmatpush1.msra.mxu0 0.0
    %1539 = vmatprep.subr.mxu0 0.0
    %1540 = vmatpush1.msra.mxu0 0.0
    %1541 = vmatprep.subr.mxu0 0.0
    %1542 = vmatpush1.msra.mxu0 0.0
    %1543 = vmatprep.subr.mxu0 0.0
    %1544 = vmatpush1.msra.mxu0 0.0
    %1545 = vmatprep.subr.mxu0 0.0
    %1546 = vmatpush1.msra.mxu0 0.0
    %1547 = vmatprep.subr.mxu0 0.0
    %1548 = vmatpush1.msra.mxu0 0.0
    %1549 = vmatprep.subr.mxu0 0.0
    %1550 = vmatpush1.msra.mxu0 0.0
    %1551 = vmatprep.subr.mxu0 0.0
    %1552 = vmatpush1.msra.mxu0 0.0
    %1553 = vmatprep.subr.mxu0 0.0
    %1554 = vmatpush1.msra.mxu0 0.0
    %1555 = vmatprep.subr.mxu0 0.0
    %1556 = vmatpush1.msra.mxu0 0.0
    %1557 = vmatprep.subr.mxu0 0.0
    %1558 = vmatpush1.msra.mxu0 0.0
    %1559 = vmatprep.subr.mxu0 0.0
    %1560 = vmatpush1.msra.mxu0 0.0
    %1561 = vmatprep.subr.mxu0 0.0
    %1562 = vmatpush1.msra.mxu0 0.0
    %1563 = vmatprep.subr.mxu0 0.0
    %1564 = vmatpush1.msra.mxu0 0.0
    %1565 = vmatprep.subr.mxu0 0.0
    %1566 = vmatpush1.msra.mxu0 0.0
    %1567 = vmatprep.subr.mxu0 0.0
    %1568 = vmatpush1.msra.mxu0 0.0
    %1569 = vmatprep.subr.mxu0 0.0
    %1570 = vmatpush1.msra.mxu0 0.0
    %1571 = vmatprep.subr.mxu0 0.0
    %1572 = vmatpush1.msra.mxu0 0.0
    %1573 = vmatprep.subr.mxu0 0.0
    %1574 = vmatpush1.msra.mxu0 0.0
    %1575 = vmatprep.subr.mxu0 0.0
    %1576 = vmatpush1.msra.mxu0 0.0
    %1577 = vmatprep.subr.mxu0 0.0
    %1578 = vmatpush1.msra.mxu0 0.0
    %1579 = vmatprep.subr.mxu0 0.0
    %1580 = vmatpush1.msra.mxu0 0.0
    %1581 = vmatprep.subr.mxu0 0.0
    %1582 = vmatpush1.msra.mxu0 0.0
    %1583 = vmatprep.subr.mxu0 0.0
    %1584 = vmatpush1.msra.mxu0 0.0
    %1585 = vmatprep.subr.mxu0 0.0
    %1586 = vmatpush1.msra.mxu0 0.0
    %1587 = vmatprep.subr.mxu0 0.0
    %1588 = vmatpush1.msra.mxu0 0.0
    %1589 = vmatprep.subr.mxu0 0.0
    %1590 = vmatpush1.msra.mxu0 0.0
    %1591 = vmatprep.subr.mxu0 0.0
    %1592 = vmatpush1.msra.mxu0 0.0
    %1593 = vmatprep.mubr.f32.mxu0 0.0
    %1594 = vmatmul.mubr.f32.gmra.mrb[0].mxu0 %v1527
    %v1595 = vpop.f32.mrb[0].mxu0
    %v1596 = vadd.f32 %v277, %v1595
    %v1597 = vpop.f32.mrb[0].mxu0
    %1598 = vdwg.mxu0
    %v1599 = vtanh.pop %v1596
    %s1600 = scalar_lea.vmem [#allocation11], 56
    %1601 = vst.msk [vmem:[%s1600] sm:$0xff] %vm170, %v1599
    %1602 = vst.msk [vmem:[#allocation5] sm:$0xff] %vm170, %v1599
    %1604 = vrot.lane.b32.xlu0 %v1517, 96
    %v1605 = vpop.permute.xlu0 %1604
    %1607 = vst.msk [vmem:[#allocation6] sm:$0xff] %vm170, %v1605
    // Predicated region
    $region94: #{tpu_custom_call.1} parent=1 // pred_check
      %p1608 = pneg %p35
    $region95: #{tpu_custom_call.1} parent=1 // pred_check_branch
      %1610 = sbr.rel (%p1608) target = $region97
    $region96: #{tpu_custom_call.1} parent=1 // pred_region
      %v1611 = vld [vmem:[#allocation4] sm:$0xff]
      %v1612 = vld [vmem:[#allocation4 + $0x8] sm:$0xff]
      %v1613 = vld [vmem:[#allocation4 + $0x10] sm:$0xff]
      %v1614 = vld [vmem:[#allocation4 + $0x18] sm:$0xff]
      %v1615 = vld [vmem:[%s5] sm:$0x1]
      %v1617 = vlaneseq
      %v1618 = vshrl.u32 %v1617, 7
      %v1619 = vsub.s32 0, %v1618
      %v1620 = vrot.slane %v1615, %v1619
      %v1623 = vsel %vm170, %v1599, 0
      %1625 = vmatprep.subr.mxu0 0.0
      %1626 = vmatpush1.msra.mxu0 %v1611
      %1627 = vmatprep.subr.mxu0 0.0
      %1628 = vmatpush1.msra.mxu0 %v1612
      %1629 = vmatprep.subr.mxu0 0.0
      %1630 = vmatpush1.msra.mxu0 %v1613
      %1631 = vmatprep.subr.mxu0 0.0
      %1632 = vmatpush1.msra.mxu0 %v1614
      %1633 = vmatprep.subr.mxu0 0.0
      %1634 = vmatpush1.msra.mxu0 0.0
      %1635 = vmatprep.subr.mxu0 0.0
      %1636 = vmatpush1.msra.mxu0 0.0
      %1637 = vmatprep.subr.mxu0 0.0
      %1638 = vmatpush1.msra.mxu0 0.0
      %1639 = vmatprep.subr.mxu0 0.0
      %1640 = vmatpush1.msra.mxu0 0.0
      %1641 = vmatprep.subr.mxu0 0.0
      %1642 = vmatpush1.msra.mxu0 0.0
      %1643 = vmatprep.subr.mxu0 0.0
      %1644 = vmatpush1.msra.mxu0 0.0
      %1645 = vmatprep.subr.mxu0 0.0
      %1646 = vmatpush1.msra.mxu0 0.0
      %1647 = vmatprep.subr.mxu0 0.0
      %1648 = vmatpush1.msra.mxu0 0.0
      %1649 = vmatprep.subr.mxu0 0.0
      %1650 = vmatpush1.msra.mxu0 0.0
      %1651 = vmatprep.subr.mxu0 0.0
      %1652 = vmatpush1.msra.mxu0 0.0
      %1653 = vmatprep.subr.mxu0 0.0
      %1654 = vmatpush1.msra.mxu0 0.0
      %1655 = vmatprep.subr.mxu0 0.0
      %1656 = vmatpush1.msra.mxu0 0.0
      %1657 = vmatprep.subr.mxu0 0.0
      %1658 = vmatpush1.msra.mxu0 0.0
      %1659 = vmatprep.subr.mxu0 0.0
      %1660 = vmatpush1.msra.mxu0 0.0
      %1661 = vmatprep.subr.mxu0 0.0
      %1662 = vmatpush1.msra.mxu0 0.0
      %1663 = vmatprep.subr.mxu0 0.0
      %1664 = vmatpush1.msra.mxu0 0.0
      %1665 = vmatprep.subr.mxu0 0.0
      %1666 = vmatpush1.msra.mxu0 0.0
      %1667 = vmatprep.subr.mxu0 0.0
      %1668 = vmatpush1.msra.mxu0 0.0
      %1669 = vmatprep.subr.mxu0 0.0
      %1670 = vmatpush1.msra.mxu0 0.0
      %1671 = vmatprep.subr.mxu0 0.0
      %1672 = vmatpush1.msra.mxu0 0.0
      %1673 = vmatprep.subr.mxu0 0.0
      %1674 = vmatpush1.msra.mxu0 0.0
      %1675 = vmatprep.subr.mxu0 0.0
      %1676 = vmatpush1.msra.mxu0 0.0
      %1677 = vmatprep.subr.mxu0 0.0
      %1678 = vmatpush1.msra.mxu0 0.0
      %1679 = vmatprep.subr.mxu0 0.0
      %1680 = vmatpush1.msra.mxu0 0.0
      %1681 = vmatprep.subr.mxu0 0.0
      %1682 = vmatpush1.msra.mxu0 0.0
      %1683 = vmatprep.subr.mxu0 0.0
      %1684 = vmatpush1.msra.mxu0 0.0
      %1685 = vmatprep.subr.mxu0 0.0
      %1686 = vmatpush1.msra.mxu0 0.0
      %1687 = vmatprep.subr.mxu0 0.0
      %1688 = vmatpush1.msra.mxu0 0.0
      %1689 = vmatprep.mubr.f32.mxu0 0.0
      %1690 = vmatmul.mubr.f32.gmra.mrb[0].mxu0 %v1623
      %v1691 = vpop.f32.mrb[0].mxu0
      %v1692 = vadd.f32 %v1620, %v1691
      %v1693 = vpop.f32.mrb[0].mxu0
      %1694 = vdwg.mxu0
      %vm1695 = vcmask 64512
      %1696 = vst.msk [vmem:[#allocation12] sm:$0xff] %vm1695, %v1692
    $region97: #{tpu_custom_call.1} parent=1 // pred_fallthru
      _
    // Predicated region
    $region98: #{tpu_custom_call.1} parent=1 // pred_check
      _
    $region99: #{tpu_custom_call.1} parent=1 // pred_check_branch
      %1698 = sbr.rel (0) target = $region101
    $region100: #{tpu_custom_call.1} parent=1 // pred_region
      %s1700 = ssub.s32 1024, 1024
      %1701 = vsyncadd [#allocation10], %s1700
      %s1702 = sshll.u32 [#allocation11], 4
      %s1703 = int_to_ptr.vmem [resolvable:$true] %s1702
      %1708 = dma.vmem_to_hbm [thread:$0]  %s1703, 1024, %s6, [#allocation10], 128, 128, 8
    $region101: #{tpu_custom_call.1} parent=1 // pred_fallthru
      _
    // Predicated region
    $region102: #{tpu_custom_call.1} parent=1 // pred_check
      _
    $region103: #{tpu_custom_call.1} parent=1 // pred_check_branch
      %1710 = sbr.rel (0) target = $region105
    $region104: #{tpu_custom_call.1} parent=1 // pred_region
      %s1712 = ssub.s32 128, 128
      %1713 = vsyncadd [#allocation13], %s1712
      %s1715 = sshll.u32 [#allocation12], 4
      %s1716 = int_to_ptr.vmem [resolvable:$true] %s1715
      %1718 = dma.vmem_to_hbm [thread:$0]  %s1716, 128, %s7, [#allocation13]
    $region105: #{tpu_custom_call.1} parent=1 // pred_fallthru
      _
    // Predicated region
    $region106: #{tpu_custom_call.1} parent=1 // pred_check
      _
    $region107: #{tpu_custom_call.1} parent=1 // pred_check_branch
      %1720 = sbr.rel (0) target = $region109
    $region108: #{tpu_custom_call.1} parent=1 // pred_region
      %1721 = dma.done [#allocation10], 1024
    $region109: #{tpu_custom_call.1} parent=1 // pred_fallthru
      _
    // Predicated region
    $region110: #{tpu_custom_call.1} parent=1 // pred_check
      _
    $region111: #{tpu_custom_call.1} parent=1 // pred_check_branch
      %1723 = sbr.rel (0) target = $region113
    $region112: #{tpu_custom_call.1} parent=1 // pred_region
      %1724 = dma.done [#allocation13], 128
    $region113: #{tpu_custom_call.1} parent=1 // pred_fallthru
      _
    %1725 = vsyncpa [#allocation9], 1
    %1726 = vsyncpa [#allocation10], 1
    %1727 = vsyncpa [#allocation13], 1
  %1728 = vsyncmov [#allocation7]
  %s1729 = vpop.sfrf %1728
  %p1730 = scmp.eq.s32.totalorder %s1729, 0
  %p1731 = pneg %p1730
  %1733 = shalt.err (%p1731)
  %s1734 = scalar_lea.sflag [#allocation7], 1
  %1735 = vsyncmov %s1734
  %s1736 = vpop.sfrf %1735
  %p1737 = scmp.eq.s32.totalorder %s1736, 0
  %p1738 = pneg %p1737
  %1740 = shalt.err (%p1738)
  %s1741 = scalar_lea.sflag [#allocation7], 2
  %1742 = vsyncmov %s1741
  %s1743 = vpop.sfrf %1742
  %p1744 = scmp.eq.s32.totalorder %s1743, 0
  %p1745 = pneg %p1744
  %1747 = shalt.err (%p1745)

</llo_original>
